<compile_context>
chip_gen: v7x
topology: tpu7x:2x2x1
jax: 0.10.0
libtpu: 0.0.40
codegen_flags: <defaults>
</compile_context>

<pallas_src>
import functools

import jax
import jax.numpy as jnp
import numpy as np
from jax import lax
from jax.experimental import pallas as pl
from jax.experimental.pallas import tpu as pltpu

EPS = 1e-5


# --------------------------------- the kernel --------------------------------
def _disc_wasserstein_kernel(*refs, n_stages, hw, chans, pool, batch):
    # refs = [x2d] + [g, be, w, b] * n_stages + [wfc_perm, bfc] + [out_ref] + scratch
    n_in = 1 + 4 * n_stages + 2
    x_ref = refs[0]
    wfc_ref = refs[n_in - 2]
    bfc_ref = refs[n_in - 1]
    out_ref = refs[n_in]
    scratch = list(refs[n_in + 1:])

    inv_pp = 1.0 / float(pool * pool)
    act = x_ref[...]                                     # [B*H0*W0, C0], f32
    si = 0

    for k in range(n_stages):
        g_ref, be_ref, w_ref, b_ref = refs[1 + 4 * k: 5 + 4 * k]
        hin, win = hw[k]
        hout, wout = hw[k + 1]
        rows_in = batch * hin * win

        # Source ref for the strided pooling loads (stage 0 reads the input ref
        # directly; later stages stage their activation through a VMEM scratch).
        if k == 0:
            src = x_ref
        else:
            src = scratch[si]; si += 1
            src[...] = act
        t_ref = scratch[si]; si += 1                     # W-pooled sums  [B*hin*wout, Cin]
        u_ref = scratch[si]; si += 1                     # fully pooled   [B*hout*wout, Cin]

        # ---- training-mode BatchNorm2d statistics over (N, H, W): one pass ----
        s = jnp.sum(act, axis=0, keepdims=True)
        ss = jnp.sum(act * act, axis=0, keepdims=True)
        mean = s * (1.0 / rows_in)
        var = jnp.maximum(ss * (1.0 / rows_in) - mean * mean, 0.0)   # biased var
        scale = g_ref[...] * lax.rsqrt(var + EPS)        # [1, Cin]
        # BN folded into the 1x1 conv:  y = (x*scale) @ W + ((be - mean*scale) @ W + b)
        bias_eff = jnp.dot(be_ref[...] - mean * scale, w_ref[...],
                           preferred_element_type=jnp.float32) + b_ref[...]   # [1, Cout]
        scale_pool = scale * inv_pp                      # also folds the 1/pool^2

        # ---- AvgPool(pool, pool), W direction: strided sublane loads ----------
        # rows are ordered (b, h, w), so for tap wp the source rows form a single
        # arithmetic progression: row = pool*out_row + wp.
        n_wrows = batch * hin * wout
        wsum = src[pl.ds(0, n_wrows, stride=pool), :]
        for wp in range(1, pool):
            wsum = wsum + src[pl.ds(wp, n_wrows, stride=pool), :]
        t_ref[...] = wsum

        # ---- AvgPool, H direction: contiguous row-block adds per (b, h_out) ---
        for q in range(batch * hout):                    # q = b*hout + ho (static)
            acc = t_ref[pl.ds(q * pool * wout, wout), :]
            for hp in range(1, pool):
                acc = acc + t_ref[pl.ds((q * pool + hp) * wout, wout), :]
            u_ref[pl.ds(q * wout, wout), :] = acc

        # ---- BN-apply + 1x1 conv at the pooled resolution (one MXU matmul) ----
        act = jnp.dot(u_ref[...] * scale_pool, w_ref[...],
                      preferred_element_type=jnp.float32) + bias_eff

    # ---- Flatten (NCHW order) + spectral-norm'd Linear(out_dim=1) -------------
    # fc weight is pre-permuted in the wrapper to rows=(h,w), lanes=c, so the head
    # is an elementwise product + a per-batch full reduction (no selector matmul).
    hn, wn = hw[n_stages]
    hw_n = hn * wn
    wfc = wfc_ref[...]                                   # [hn*wn, Cn]
    for b in range(batch):
        zb = act[b * hw_n:(b + 1) * hw_n, :] * wfc
        sb = jnp.sum(jnp.sum(zb, axis=1, keepdims=True), axis=0, keepdims=True)
        out_ref[pl.ds(b, 1), :] = sb + bfc_ref[...]


# --------------------------------- the wrapper --------------------------------
def discriminator_wasserstein_forward(x_nchw, P, layer_dims, pool):
    """x_nchw: [B, Cin, H, W] (PyTorch layout) -> Wasserstein logits [B, 1]."""
    x = jnp.transpose(x_nchw, (0, 2, 3, 1)).astype(jnp.float32)      # -> NHWC
    B, H, W, Cin = x.shape
    n_stages = len(layer_dims)
    chans = (Cin,) + tuple(layer_dims)

    hw = [(H, W)]
    for _ in range(n_stages):
        h, w = hw[-1]
        assert h % pool == 0 and w % pool == 0, "AvgPool must tile the spatial dims"
        hw.append((h // pool, w // pool))
    hw = tuple(hw)
    hn, wn = hw[-1]
    cn = layer_dims[-1]

    # Lane-dense 2-D view: rows = (b, h, w), lanes = channels.
    x2d = x.reshape(B * H * W, Cin)

    args = [x2d]
    for k in range(n_stages):
        args += [P[f'g{k}'].reshape(1, -1), P[f'be{k}'].reshape(1, -1),
                 P[f'w{k}'], P[f'b{k}'].reshape(1, -1)]

    # Rearrange the spectral-normed fc weight from PyTorch's NCHW flatten order
    # (c, h, w) into this kernel's (rows=(h,w), lanes=c) layout (no batch tiling;
    # the head loops over batch).
    wfc_perm = P['wfc'].reshape(cn, hn, wn).transpose(1, 2, 0).reshape(hn * wn, cn)
    args += [wfc_perm, P['bfc'].reshape(1, 1)]

    # Tiny per-stage VMEM scratch (a few KiB total): stage-input slab (k>0),
    # W-pooled sums, fully pooled sums.
    scratch_shapes = []
    for k in range(n_stages):
        hin, win = hw[k]
        hout, wout = hw[k + 1]
        cin = chans[k]
        if k > 0:
            scratch_shapes.append(pltpu.VMEM((B * hin * win, cin), jnp.float32))
        scratch_shapes.append(pltpu.VMEM((B * hin * wout, cin), jnp.float32))
        scratch_shapes.append(pltpu.VMEM((B * hout * wout, cin), jnp.float32))

    kernel = functools.partial(_disc_wasserstein_kernel, n_stages=n_stages,
                               hw=hw, chans=chans, pool=pool, batch=B)
    # Gridless, fully VMEM-resident single invocation (no grid -> no
    # dimension_semantics; see header comment for the v7x megacore scale-up path).
    return pl.pallas_call(
        kernel,
        out_shape=jax.ShapeDtypeStruct((B, 1), jnp.float32),
        in_specs=[pl.BlockSpec(memory_space=pltpu.MemorySpace.VMEM)] * len(args),
        out_specs=pl.BlockSpec(memory_space=pltpu.MemorySpace.VMEM),
        scratch_shapes=scratch_shapes,
    )(*args)


# ------------------------- parameter setup (plain-JAX glue) -------------------------
def _spectral_normalize(w2d, n_iter=50):
    u = jnp.full((w2d.shape[0],), 1.0 / jnp.sqrt(w2d.shape[0]), jnp.float32)
    v = None
    for _ in range(n_iter):
        v = w2d.T @ u
        v = v / (jnp.linalg.norm(v) + 1e-12)
        u = w2d @ v
        u = u / (jnp.linalg.norm(u) + 1e-12)
    sigma = u @ (w2d @ v)
    return w2d / sigma


def init_params(key, in_channels, layer_dims, spatial, pool):
    n_stages = len(layer_dims)
    chans = (in_channels,) + tuple(layer_dims)
    keys = jax.random.split(key, 4 * n_stages + 2)
    P, ki = {}, 0
    for k in range(n_stages):
        cin, cout = chans[k], chans[k + 1]
        # identity_block = BatchNorm2d(cin) -> spectral_norm(Conv2d(cin, cout, 1))
        P[f'g{k}'] = 1.0 + 0.1 * jax.random.normal(keys[ki], (cin,), jnp.float32); ki += 1
        P[f'be{k}'] = 0.1 * jax.random.normal(keys[ki], (cin,), jnp.float32); ki += 1
        w = 0.2 * jax.random.normal(keys[ki], (cout, cin), jnp.float32); ki += 1   # PyTorch [out, in, 1, 1]
        P[f'w{k}'] = _spectral_normalize(w).T                                      # -> [in, out]
        P[f'b{k}'] = 0.1 * jax.random.normal(keys[ki], (cout,), jnp.float32); ki += 1
    s_out = spatial // (pool ** n_stages)
    feat = layer_dims[-1] * s_out * s_out
    wfc = 0.2 * jax.random.normal(keys[ki], (1, feat), jnp.float32); ki += 1
    P['wfc'] = _spectral_normalize(wfc)                                            # [1, feat], PyTorch layout
    P['bfc'] = 0.1 * jax.random.normal(keys[ki], (1,), jnp.float32); ki += 1
    return P


# ------------------------------- pure-JAX reference -------------------------------
def ref_forward_nchw(x_nchw, P, layer_dims, pool):
    """Op-by-op mirror of the PyTorch graph (NCHW)."""
    x = x_nchw.astype(jnp.float32)
    for k in range(len(layer_dims)):
        m = x.mean(axis=(0, 2, 3), keepdims=True)
        v = ((x - m) ** 2).mean(axis=(0, 2, 3), keepdims=True)      # biased variance
        xn = ((x - m) / jnp.sqrt(v + EPS) * P[f'g{k}'].reshape(1, -1, 1, 1)
              + P[f'be{k}'].reshape(1, -1, 1, 1))
        y = (jnp.einsum('bihw,io->bohw', xn, P[f'w{k}'])
             + P[f'b{k}'].reshape(1, -1, 1, 1))
        b_, c_, h_, w_ = y.shape
        x = y.reshape(b_, c_, h_ // pool, pool, w_ // pool, pool).mean(axis=(3, 5))
    flat = x.reshape(x.shape[0], -1)                                 # NCHW flatten
    return flat @ P['wfc'].T + P['bfc'].reshape(1, 1)


if __name__ == "__main__":
    # Config consistent with the module: INPUT_CHANNEL_SIZE=4, INPUT_SPATIAL_SIZE=16,
    # discrim_layer_dims=[8, 16], discrim_pool_size=2 (the module's
    # `spatial_dim = S // 2**len(layer_dims)` formula presumes halving per stage).
    B, Cin, S = 2, 4, 16
    layer_dims = [8, 16]
    pool = 2

    key = jax.random.PRNGKey(0)
    kx, kp = jax.random.split(key)
    x = jax.random.normal(kx, (B, Cin, S, S), jnp.float32)           # NCHW like PyTorch
    P = init_params(kp, Cin, layer_dims, S, pool)

    out = discriminator_wasserstein_forward(x, P, layer_dims, pool)
    out = jax.block_until_ready(out)
    assert out.shape == (B, 1)

    ref = ref_forward_nchw(x, P, layer_dims, pool)
    np.testing.assert_allclose(np.asarray(out), np.asarray(ref), atol=2e-4, rtol=2e-4)

    print("KERNEL_OK")
</pallas_src>

<mosaic_0001>
module attributes {stable_mosaic.version = 11 : i64} {
  func.func @_disc_wasserstein_kernel(%arg0: memref<512x4xf32, #tpu.memory_space<vmem>>, %arg1: memref<1x4xf32, #tpu.memory_space<vmem>>, %arg2: memref<1x4xf32, #tpu.memory_space<vmem>>, %arg3: memref<4x8xf32, #tpu.memory_space<vmem>>, %arg4: memref<1x8xf32, #tpu.memory_space<vmem>>, %arg5: memref<1x8xf32, #tpu.memory_space<vmem>>, %arg6: memref<1x8xf32, #tpu.memory_space<vmem>>, %arg7: memref<8x16xf32, #tpu.memory_space<vmem>>, %arg8: memref<1x16xf32, #tpu.memory_space<vmem>>, %arg9: memref<16x16xf32, #tpu.memory_space<vmem>>, %arg10: memref<1x1xf32, #tpu.memory_space<vmem>>, %arg11: memref<2x1xf32, #tpu.memory_space<vmem>>, %arg12: memref<256x4xf32, #tpu.memory_space<vmem>>, %arg13: memref<128x4xf32, #tpu.memory_space<vmem>>, %arg14: memref<128x8xf32, #tpu.memory_space<vmem>>, %arg15: memref<64x8xf32, #tpu.memory_space<vmem>>, %arg16: memref<32x8xf32, #tpu.memory_space<vmem>>) attributes {dimension_semantics = [], scalar_prefetch = 0 : i64, scratch_operands = 5 : i64, tpu.core_type = #tpu.core_type<tc>} {
    %c0 = arith.constant 0 : index
    %c0_0 = arith.constant 0 : index
    %0 = vector.load %arg0[%c0, %c0_0] : memref<512x4xf32, #tpu.memory_space<vmem>>, vector<512x4xf32>
    %cst = arith.constant dense<0.000000e+00> : vector<4xf32>
    %1 = vector.multi_reduction <add>, %0, %cst [0] : vector<512x4xf32> to vector<4xf32>
    %2 = vector.shape_cast %1 : vector<4xf32> to vector<1x4xf32>
    %3 = arith.mulf %0, %0 : vector<512x4xf32>
    %cst_1 = arith.constant dense<0.000000e+00> : vector<4xf32>
    %4 = vector.multi_reduction <add>, %3, %cst_1 [0] : vector<512x4xf32> to vector<4xf32>
    %5 = vector.shape_cast %4 : vector<4xf32> to vector<1x4xf32>
    %cst_2 = arith.constant 0.001953125 : f32
    %6 = vector.broadcast %cst_2 : f32 to vector<1x4xf32>
    %7 = arith.mulf %2, %6 : vector<1x4xf32>
    %cst_3 = arith.constant 0.001953125 : f32
    %8 = vector.broadcast %cst_3 : f32 to vector<1x4xf32>
    %9 = arith.mulf %5, %8 : vector<1x4xf32>
    %10 = arith.mulf %7, %7 : vector<1x4xf32>
    %11 = arith.subf %9, %10 : vector<1x4xf32>
    %cst_4 = arith.constant 0.000000e+00 : f32
    %12 = vector.broadcast %cst_4 : f32 to vector<1x4xf32>
    %13 = arith.maximumf %11, %12 : vector<1x4xf32>
    %c0_5 = arith.constant 0 : index
    %c0_6 = arith.constant 0 : index
    %14 = vector.load %arg1[%c0_5, %c0_6] : memref<1x4xf32, #tpu.memory_space<vmem>>, vector<1x4xf32>
    %cst_7 = arith.constant 9.99999974E-6 : f32
    %15 = vector.broadcast %cst_7 : f32 to vector<1x4xf32>
    %16 = arith.addf %13, %15 : vector<1x4xf32>
    %17 = math.rsqrt %16 : vector<1x4xf32>
    %18 = arith.mulf %14, %17 : vector<1x4xf32>
    %c0_8 = arith.constant 0 : index
    %c0_9 = arith.constant 0 : index
    %19 = vector.load %arg2[%c0_8, %c0_9] : memref<1x4xf32, #tpu.memory_space<vmem>>, vector<1x4xf32>
    %20 = arith.mulf %7, %18 : vector<1x4xf32>
    %21 = arith.subf %19, %20 : vector<1x4xf32>
    %c0_10 = arith.constant 0 : index
    %c0_11 = arith.constant 0 : index
    %22 = vector.load %arg3[%c0_10, %c0_11] : memref<4x8xf32, #tpu.memory_space<vmem>>, vector<4x8xf32>
    %cst_12 = arith.constant dense<0.000000e+00> : vector<1x8xf32>
    %23 = tpu.matmul %21, %22, %cst_12 {dimension_numbers = #tpu.dot_dimension_numbers<[1], [0], [0], [1], [0, 0, 1, 1], [], []>} : vector<1x4xf32>, vector<4x8xf32>, vector<1x8xf32> -> vector<1x8xf32>
    %c0_13 = arith.constant 0 : index
    %c0_14 = arith.constant 0 : index
    %24 = vector.load %arg4[%c0_13, %c0_14] : memref<1x8xf32, #tpu.memory_space<vmem>>, vector<1x8xf32>
    %25 = arith.addf %23, %24 : vector<1x8xf32>
    %cst_15 = arith.constant 2.500000e-01 : f32
    %26 = vector.broadcast %cst_15 : f32 to vector<1x4xf32>
    %27 = arith.mulf %18, %26 : vector<1x4xf32>
    %c0_16 = arith.constant 0 : index
    %c0_17 = arith.constant 0 : index
    %28 = tpu.strided_load %arg0[%c0_16, %c0_17] {strides = array<i32: 2, 1>} : memref<512x4xf32, #tpu.memory_space<vmem>>, vector<256x4xf32>
    %c1 = arith.constant 1 : index
    %c0_18 = arith.constant 0 : index
    %29 = tpu.strided_load %arg0[%c1, %c0_18] {strides = array<i32: 2, 1>} : memref<512x4xf32, #tpu.memory_space<vmem>>, vector<256x4xf32>
    %30 = arith.addf %28, %29 : vector<256x4xf32>
    %c0_19 = arith.constant 0 : index
    %c0_20 = arith.constant 0 : index
    %31 = vector.load %arg12[%c0_19, %c0_20] : memref<256x4xf32, #tpu.memory_space<vmem>>, vector<256x4xf32>
    tpu.vector_store %arg12[%c0_19, %c0_20], %30 {strides = array<i32>} : memref<256x4xf32, #tpu.memory_space<vmem>>, vector<256x4xf32>,
    %c0_21 = arith.constant 0 : index
    %c0_22 = arith.constant 0 : index
    %32 = vector.load %arg12[%c0_21, %c0_22] : memref<256x4xf32, #tpu.memory_space<vmem>>, vector<8x4xf32>
    %c8 = arith.constant 8 : index
    %c0_23 = arith.constant 0 : index
    %33 = vector.load %arg12[%c8, %c0_23] : memref<256x4xf32, #tpu.memory_space<vmem>>, vector<8x4xf32>
    %34 = arith.addf %32, %33 : vector<8x4xf32>
    %c0_24 = arith.constant 0 : index
    %c0_25 = arith.constant 0 : index
    %35 = vector.load %arg13[%c0_24, %c0_25] : memref<128x4xf32, #tpu.memory_space<vmem>>, vector<8x4xf32>
    tpu.vector_store %arg13[%c0_24, %c0_25], %34 {strides = array<i32>} : memref<128x4xf32, #tpu.memory_space<vmem>>, vector<8x4xf32>,
    %c16 = arith.constant 16 : index
    %c0_26 = arith.constant 0 : index
    %36 = vector.load %arg12[%c16, %c0_26] : memref<256x4xf32, #tpu.memory_space<vmem>>, vector<8x4xf32>
    %c24 = arith.constant 24 : index
    %c0_27 = arith.constant 0 : index
    %37 = vector.load %arg12[%c24, %c0_27] : memref<256x4xf32, #tpu.memory_space<vmem>>, vector<8x4xf32>
    %38 = arith.addf %36, %37 : vector<8x4xf32>
    %c8_28 = arith.constant 8 : index
    %c0_29 = arith.constant 0 : index
    %39 = vector.load %arg13[%c8_28, %c0_29] : memref<128x4xf32, #tpu.memory_space<vmem>>, vector<8x4xf32>
    tpu.vector_store %arg13[%c8_28, %c0_29], %38 {strides = array<i32>} : memref<128x4xf32, #tpu.memory_space<vmem>>, vector<8x4xf32>,
    %c32 = arith.constant 32 : index
    %c0_30 = arith.constant 0 : index
    %40 = vector.load %arg12[%c32, %c0_30] : memref<256x4xf32, #tpu.memory_space<vmem>>, vector<8x4xf32>
    %c40 = arith.constant 40 : index
    %c0_31 = arith.constant 0 : index
    %41 = vector.load %arg12[%c40, %c0_31] : memref<256x4xf32, #tpu.memory_space<vmem>>, vector<8x4xf32>
    %42 = arith.addf %40, %41 : vector<8x4xf32>
    %c16_32 = arith.constant 16 : index
    %c0_33 = arith.constant 0 : index
    %43 = vector.load %arg13[%c16_32, %c0_33] : memref<128x4xf32, #tpu.memory_space<vmem>>, vector<8x4xf32>
    tpu.vector_store %arg13[%c16_32, %c0_33], %42 {strides = array<i32>} : memref<128x4xf32, #tpu.memory_space<vmem>>, vector<8x4xf32>,
    %c48 = arith.constant 48 : index
    %c0_34 = arith.constant 0 : index
    %44 = vector.load %arg12[%c48, %c0_34] : memref<256x4xf32, #tpu.memory_space<vmem>>, vector<8x4xf32>
    %c56 = arith.constant 56 : index
    %c0_35 = arith.constant 0 : index
    %45 = vector.load %arg12[%c56, %c0_35] : memref<256x4xf32, #tpu.memory_space<vmem>>, vector<8x4xf32>
    %46 = arith.addf %44, %45 : vector<8x4xf32>
    %c24_36 = arith.constant 24 : index
    %c0_37 = arith.constant 0 : index
    %47 = vector.load %arg13[%c24_36, %c0_37] : memref<128x4xf32, #tpu.memory_space<vmem>>, vector<8x4xf32>
    tpu.vector_store %arg13[%c24_36, %c0_37], %46 {strides = array<i32>} : memref<128x4xf32, #tpu.memory_space<vmem>>, vector<8x4xf32>,
    %c64 = arith.constant 64 : index
    %c0_38 = arith.constant 0 : index
    %48 = vector.load %arg12[%c64, %c0_38] : memref<256x4xf32, #tpu.memory_space<vmem>>, vector<8x4xf32>
    %c72 = arith.constant 72 : index
    %c0_39 = arith.constant 0 : index
    %49 = vector.load %arg12[%c72, %c0_39] : memref<256x4xf32, #tpu.memory_space<vmem>>, vector<8x4xf32>
    %50 = arith.addf %48, %49 : vector<8x4xf32>
    %c32_40 = arith.constant 32 : index
    %c0_41 = arith.constant 0 : index
    %51 = vector.load %arg13[%c32_40, %c0_41] : memref<128x4xf32, #tpu.memory_space<vmem>>, vector<8x4xf32>
    tpu.vector_store %arg13[%c32_40, %c0_41], %50 {strides = array<i32>} : memref<128x4xf32, #tpu.memory_space<vmem>>, vector<8x4xf32>,
    %c80 = arith.constant 80 : index
    %c0_42 = arith.constant 0 : index
    %52 = vector.load %arg12[%c80, %c0_42] : memref<256x4xf32, #tpu.memory_space<vmem>>, vector<8x4xf32>
    %c88 = arith.constant 88 : index
    %c0_43 = arith.constant 0 : index
    %53 = vector.load %arg12[%c88, %c0_43] : memref<256x4xf32, #tpu.memory_space<vmem>>, vector<8x4xf32>
    %54 = arith.addf %52, %53 : vector<8x4xf32>
    %c40_44 = arith.constant 40 : index
    %c0_45 = arith.constant 0 : index
    %55 = vector.load %arg13[%c40_44, %c0_45] : memref<128x4xf32, #tpu.memory_space<vmem>>, vector<8x4xf32>
    tpu.vector_store %arg13[%c40_44, %c0_45], %54 {strides = array<i32>} : memref<128x4xf32, #tpu.memory_space<vmem>>, vector<8x4xf32>,
    %c96 = arith.constant 96 : index
    %c0_46 = arith.constant 0 : index
    %56 = vector.load %arg12[%c96, %c0_46] : memref<256x4xf32, #tpu.memory_space<vmem>>, vector<8x4xf32>
    %c104 = arith.constant 104 : index
    %c0_47 = arith.constant 0 : index
    %57 = vector.load %arg12[%c104, %c0_47] : memref<256x4xf32, #tpu.memory_space<vmem>>, vector<8x4xf32>
    %58 = arith.addf %56, %57 : vector<8x4xf32>
    %c48_48 = arith.constant 48 : index
    %c0_49 = arith.constant 0 : index
    %59 = vector.load %arg13[%c48_48, %c0_49] : memref<128x4xf32, #tpu.memory_space<vmem>>, vector<8x4xf32>
    tpu.vector_store %arg13[%c48_48, %c0_49], %58 {strides = array<i32>} : memref<128x4xf32, #tpu.memory_space<vmem>>, vector<8x4xf32>,
    %c112 = arith.constant 112 : index
    %c0_50 = arith.constant 0 : index
    %60 = vector.load %arg12[%c112, %c0_50] : memref<256x4xf32, #tpu.memory_space<vmem>>, vector<8x4xf32>
    %c120 = arith.constant 120 : index
    %c0_51 = arith.constant 0 : index
    %61 = vector.load %arg12[%c120, %c0_51] : memref<256x4xf32, #tpu.memory_space<vmem>>, vector<8x4xf32>
    %62 = arith.addf %60, %61 : vector<8x4xf32>
    %c56_52 = arith.constant 56 : index
    %c0_53 = arith.constant 0 : index
    %63 = vector.load %arg13[%c56_52, %c0_53] : memref<128x4xf32, #tpu.memory_space<vmem>>, vector<8x4xf32>
    tpu.vector_store %arg13[%c56_52, %c0_53], %62 {strides = array<i32>} : memref<128x4xf32, #tpu.memory_space<vmem>>, vector<8x4xf32>,
    %c128 = arith.constant 128 : index
    %c0_54 = arith.constant 0 : index
    %64 = vector.load %arg12[%c128, %c0_54] : memref<256x4xf32, #tpu.memory_space<vmem>>, vector<8x4xf32>
    %c136 = arith.constant 136 : index
    %c0_55 = arith.constant 0 : index
    %65 = vector.load %arg12[%c136, %c0_55] : memref<256x4xf32, #tpu.memory_space<vmem>>, vector<8x4xf32>
    %66 = arith.addf %64, %65 : vector<8x4xf32>
    %c64_56 = arith.constant 64 : index
    %c0_57 = arith.constant 0 : index
    %67 = vector.load %arg13[%c64_56, %c0_57] : memref<128x4xf32, #tpu.memory_space<vmem>>, vector<8x4xf32>
    tpu.vector_store %arg13[%c64_56, %c0_57], %66 {strides = array<i32>} : memref<128x4xf32, #tpu.memory_space<vmem>>, vector<8x4xf32>,
    %c144 = arith.constant 144 : index
    %c0_58 = arith.constant 0 : index
    %68 = vector.load %arg12[%c144, %c0_58] : memref<256x4xf32, #tpu.memory_space<vmem>>, vector<8x4xf32>
    %c152 = arith.constant 152 : index
    %c0_59 = arith.constant 0 : index
    %69 = vector.load %arg12[%c152, %c0_59] : memref<256x4xf32, #tpu.memory_space<vmem>>, vector<8x4xf32>
    %70 = arith.addf %68, %69 : vector<8x4xf32>
    %c72_60 = arith.constant 72 : index
    %c0_61 = arith.constant 0 : index
    %71 = vector.load %arg13[%c72_60, %c0_61] : memref<128x4xf32, #tpu.memory_space<vmem>>, vector<8x4xf32>
    tpu.vector_store %arg13[%c72_60, %c0_61], %70 {strides = array<i32>} : memref<128x4xf32, #tpu.memory_space<vmem>>, vector<8x4xf32>,
    %c160 = arith.constant 160 : index
    %c0_62 = arith.constant 0 : index
    %72 = vector.load %arg12[%c160, %c0_62] : memref<256x4xf32, #tpu.memory_space<vmem>>, vector<8x4xf32>
    %c168 = arith.constant 168 : index
    %c0_63 = arith.constant 0 : index
    %73 = vector.load %arg12[%c168, %c0_63] : memref<256x4xf32, #tpu.memory_space<vmem>>, vector<8x4xf32>
    %74 = arith.addf %72, %73 : vector<8x4xf32>
    %c80_64 = arith.constant 80 : index
    %c0_65 = arith.constant 0 : index
    %75 = vector.load %arg13[%c80_64, %c0_65] : memref<128x4xf32, #tpu.memory_space<vmem>>, vector<8x4xf32>
    tpu.vector_store %arg13[%c80_64, %c0_65], %74 {strides = array<i32>} : memref<128x4xf32, #tpu.memory_space<vmem>>, vector<8x4xf32>,
    %c176 = arith.constant 176 : index
    %c0_66 = arith.constant 0 : index
    %76 = vector.load %arg12[%c176, %c0_66] : memref<256x4xf32, #tpu.memory_space<vmem>>, vector<8x4xf32>
    %c184 = arith.constant 184 : index
    %c0_67 = arith.constant 0 : index
    %77 = vector.load %arg12[%c184, %c0_67] : memref<256x4xf32, #tpu.memory_space<vmem>>, vector<8x4xf32>
    %78 = arith.addf %76, %77 : vector<8x4xf32>
    %c88_68 = arith.constant 88 : index
    %c0_69 = arith.constant 0 : index
    %79 = vector.load %arg13[%c88_68, %c0_69] : memref<128x4xf32, #tpu.memory_space<vmem>>, vector<8x4xf32>
    tpu.vector_store %arg13[%c88_68, %c0_69], %78 {strides = array<i32>} : memref<128x4xf32, #tpu.memory_space<vmem>>, vector<8x4xf32>,
    %c192 = arith.constant 192 : index
    %c0_70 = arith.constant 0 : index
    %80 = vector.load %arg12[%c192, %c0_70] : memref<256x4xf32, #tpu.memory_space<vmem>>, vector<8x4xf32>
    %c200 = arith.constant 200 : index
    %c0_71 = arith.constant 0 : index
    %81 = vector.load %arg12[%c200, %c0_71] : memref<256x4xf32, #tpu.memory_space<vmem>>, vector<8x4xf32>
    %82 = arith.addf %80, %81 : vector<8x4xf32>
    %c96_72 = arith.constant 96 : index
    %c0_73 = arith.constant 0 : index
    %83 = vector.load %arg13[%c96_72, %c0_73] : memref<128x4xf32, #tpu.memory_space<vmem>>, vector<8x4xf32>
    tpu.vector_store %arg13[%c96_72, %c0_73], %82 {strides = array<i32>} : memref<128x4xf32, #tpu.memory_space<vmem>>, vector<8x4xf32>,
    %c208 = arith.constant 208 : index
    %c0_74 = arith.constant 0 : index
    %84 = vector.load %arg12[%c208, %c0_74] : memref<256x4xf32, #tpu.memory_space<vmem>>, vector<8x4xf32>
    %c216 = arith.constant 216 : index
    %c0_75 = arith.constant 0 : index
    %85 = vector.load %arg12[%c216, %c0_75] : memref<256x4xf32, #tpu.memory_space<vmem>>, vector<8x4xf32>
    %86 = arith.addf %84, %85 : vector<8x4xf32>
    %c104_76 = arith.constant 104 : index
    %c0_77 = arith.constant 0 : index
    %87 = vector.load %arg13[%c104_76, %c0_77] : memref<128x4xf32, #tpu.memory_space<vmem>>, vector<8x4xf32>
    tpu.vector_store %arg13[%c104_76, %c0_77], %86 {strides = array<i32>} : memref<128x4xf32, #tpu.memory_space<vmem>>, vector<8x4xf32>,
    %c224 = arith.constant 224 : index
    %c0_78 = arith.constant 0 : index
    %88 = vector.load %arg12[%c224, %c0_78] : memref<256x4xf32, #tpu.memory_space<vmem>>, vector<8x4xf32>
    %c232 = arith.constant 232 : index
    %c0_79 = arith.constant 0 : index
    %89 = vector.load %arg12[%c232, %c0_79] : memref<256x4xf32, #tpu.memory_space<vmem>>, vector<8x4xf32>
    %90 = arith.addf %88, %89 : vector<8x4xf32>
    %c112_80 = arith.constant 112 : index
    %c0_81 = arith.constant 0 : index
    %91 = vector.load %arg13[%c112_80, %c0_81] : memref<128x4xf32, #tpu.memory_space<vmem>>, vector<8x4xf32>
    tpu.vector_store %arg13[%c112_80, %c0_81], %90 {strides = array<i32>} : memref<128x4xf32, #tpu.memory_space<vmem>>, vector<8x4xf32>,
    %c240 = arith.constant 240 : index
    %c0_82 = arith.constant 0 : index
    %92 = vector.load %arg12[%c240, %c0_82] : memref<256x4xf32, #tpu.memory_space<vmem>>, vector<8x4xf32>
    %c248 = arith.constant 248 : index
    %c0_83 = arith.constant 0 : index
    %93 = vector.load %arg12[%c248, %c0_83] : memref<256x4xf32, #tpu.memory_space<vmem>>, vector<8x4xf32>
    %94 = arith.addf %92, %93 : vector<8x4xf32>
    %c120_84 = arith.constant 120 : index
    %c0_85 = arith.constant 0 : index
    %95 = vector.load %arg13[%c120_84, %c0_85] : memref<128x4xf32, #tpu.memory_space<vmem>>, vector<8x4xf32>
    tpu.vector_store %arg13[%c120_84, %c0_85], %94 {strides = array<i32>} : memref<128x4xf32, #tpu.memory_space<vmem>>, vector<8x4xf32>,
    %c0_86 = arith.constant 0 : index
    %c0_87 = arith.constant 0 : index
    %96 = vector.load %arg13[%c0_86, %c0_87] : memref<128x4xf32, #tpu.memory_space<vmem>>, vector<128x4xf32>
    %97 = vector.broadcast %27 : vector<1x4xf32> to vector<128x4xf32>
    %98 = arith.mulf %96, %97 : vector<128x4xf32>
    %c0_88 = arith.constant 0 : index
    %c0_89 = arith.constant 0 : index
    %99 = vector.load %arg3[%c0_88, %c0_89] : memref<4x8xf32, #tpu.memory_space<vmem>>, vector<4x8xf32>
    %cst_90 = arith.constant dense<0.000000e+00> : vector<128x8xf32>
    %100 = tpu.matmul %98, %99, %cst_90 {dimension_numbers = #tpu.dot_dimension_numbers<[1], [0], [0], [1], [0, 0, 1, 1], [], []>} : vector<128x4xf32>, vector<4x8xf32>, vector<128x8xf32> -> vector<128x8xf32>
    %101 = vector.broadcast %25 : vector<1x8xf32> to vector<128x8xf32>
    %102 = arith.addf %100, %101 : vector<128x8xf32>
    %c0_91 = arith.constant 0 : index
    %c0_92 = arith.constant 0 : index
    %103 = vector.load %arg14[%c0_91, %c0_92] : memref<128x8xf32, #tpu.memory_space<vmem>>, vector<128x8xf32>
    tpu.vector_store %arg14[%c0_91, %c0_92], %102 {strides = array<i32>} : memref<128x8xf32, #tpu.memory_space<vmem>>, vector<128x8xf32>,
    %cst_93 = arith.constant dense<0.000000e+00> : vector<8xf32>
    %104 = vector.multi_reduction <add>, %102, %cst_93 [0] : vector<128x8xf32> to vector<8xf32>
    %105 = vector.shape_cast %104 : vector<8xf32> to vector<1x8xf32>
    %106 = arith.mulf %102, %102 : vector<128x8xf32>
    %cst_94 = arith.constant dense<0.000000e+00> : vector<8xf32>
    %107 = vector.multi_reduction <add>, %106, %cst_94 [0] : vector<128x8xf32> to vector<8xf32>
    %108 = vector.shape_cast %107 : vector<8xf32> to vector<1x8xf32>
    %cst_95 = arith.constant 7.812500e-03 : f32
    %109 = vector.broadcast %cst_95 : f32 to vector<1x8xf32>
    %110 = arith.mulf %105, %109 : vector<1x8xf32>
    %cst_96 = arith.constant 7.812500e-03 : f32
    %111 = vector.broadcast %cst_96 : f32 to vector<1x8xf32>
    %112 = arith.mulf %108, %111 : vector<1x8xf32>
    %113 = arith.mulf %110, %110 : vector<1x8xf32>
    %114 = arith.subf %112, %113 : vector<1x8xf32>
    %cst_97 = arith.constant 0.000000e+00 : f32
    %115 = vector.broadcast %cst_97 : f32 to vector<1x8xf32>
    %116 = arith.maximumf %114, %115 : vector<1x8xf32>
    %c0_98 = arith.constant 0 : index
    %c0_99 = arith.constant 0 : index
    %117 = vector.load %arg5[%c0_98, %c0_99] : memref<1x8xf32, #tpu.memory_space<vmem>>, vector<1x8xf32>
    %cst_100 = arith.constant 9.99999974E-6 : f32
    %118 = vector.broadcast %cst_100 : f32 to vector<1x8xf32>
    %119 = arith.addf %116, %118 : vector<1x8xf32>
    %120 = math.rsqrt %119 : vector<1x8xf32>
    %121 = arith.mulf %117, %120 : vector<1x8xf32>
    %c0_101 = arith.constant 0 : index
    %c0_102 = arith.constant 0 : index
    %122 = vector.load %arg6[%c0_101, %c0_102] : memref<1x8xf32, #tpu.memory_space<vmem>>, vector<1x8xf32>
    %123 = arith.mulf %110, %121 : vector<1x8xf32>
    %124 = arith.subf %122, %123 : vector<1x8xf32>
    %c0_103 = arith.constant 0 : index
    %c0_104 = arith.constant 0 : index
    %125 = vector.load %arg7[%c0_103, %c0_104] : memref<8x16xf32, #tpu.memory_space<vmem>>, vector<8x16xf32>
    %cst_105 = arith.constant dense<0.000000e+00> : vector<1x16xf32>
    %126 = tpu.matmul %124, %125, %cst_105 {dimension_numbers = #tpu.dot_dimension_numbers<[1], [0], [0], [1], [0, 0, 1, 1], [], []>} : vector<1x8xf32>, vector<8x16xf32>, vector<1x16xf32> -> vector<1x16xf32>
    %c0_106 = arith.constant 0 : index
    %c0_107 = arith.constant 0 : index
    %127 = vector.load %arg8[%c0_106, %c0_107] : memref<1x16xf32, #tpu.memory_space<vmem>>, vector<1x16xf32>
    %128 = arith.addf %126, %127 : vector<1x16xf32>
    %cst_108 = arith.constant 2.500000e-01 : f32
    %129 = vector.broadcast %cst_108 : f32 to vector<1x8xf32>
    %130 = arith.mulf %121, %129 : vector<1x8xf32>
    %c0_109 = arith.constant 0 : index
    %c0_110 = arith.constant 0 : index
    %131 = tpu.strided_load %arg14[%c0_109, %c0_110] {strides = array<i32: 2, 1>} : memref<128x8xf32, #tpu.memory_space<vmem>>, vector<64x8xf32>
    %c1_111 = arith.constant 1 : index
    %c0_112 = arith.constant 0 : index
    %132 = tpu.strided_load %arg14[%c1_111, %c0_112] {strides = array<i32: 2, 1>} : memref<128x8xf32, #tpu.memory_space<vmem>>, vector<64x8xf32>
    %133 = arith.addf %131, %132 : vector<64x8xf32>
    %c0_113 = arith.constant 0 : index
    %c0_114 = arith.constant 0 : index
    %134 = vector.load %arg15[%c0_113, %c0_114] : memref<64x8xf32, #tpu.memory_space<vmem>>, vector<64x8xf32>
    tpu.vector_store %arg15[%c0_113, %c0_114], %133 {strides = array<i32>} : memref<64x8xf32, #tpu.memory_space<vmem>>, vector<64x8xf32>,
    %c0_115 = arith.constant 0 : index
    %c0_116 = arith.constant 0 : index
    %135 = vector.load %arg15[%c0_115, %c0_116] : memref<64x8xf32, #tpu.memory_space<vmem>>, vector<4x8xf32>
    %c4 = arith.constant 4 : index
    %c0_117 = arith.constant 0 : index
    %136 = vector.load %arg15[%c4, %c0_117] : memref<64x8xf32, #tpu.memory_space<vmem>>, vector<4x8xf32>
    %137 = arith.addf %135, %136 : vector<4x8xf32>
    %c0_118 = arith.constant 0 : index
    %c0_119 = arith.constant 0 : index
    %138 = vector.load %arg16[%c0_118, %c0_119] : memref<32x8xf32, #tpu.memory_space<vmem>>, vector<4x8xf32>
    tpu.vector_store %arg16[%c0_118, %c0_119], %137 {strides = array<i32>} : memref<32x8xf32, #tpu.memory_space<vmem>>, vector<4x8xf32>,
    %c8_120 = arith.constant 8 : index
    %c0_121 = arith.constant 0 : index
    %139 = vector.load %arg15[%c8_120, %c0_121] : memref<64x8xf32, #tpu.memory_space<vmem>>, vector<4x8xf32>
    %c12 = arith.constant 12 : index
    %c0_122 = arith.constant 0 : index
    %140 = vector.load %arg15[%c12, %c0_122] : memref<64x8xf32, #tpu.memory_space<vmem>>, vector<4x8xf32>
    %141 = arith.addf %139, %140 : vector<4x8xf32>
    %c4_123 = arith.constant 4 : index
    %c0_124 = arith.constant 0 : index
    %142 = vector.load %arg16[%c4_123, %c0_124] : memref<32x8xf32, #tpu.memory_space<vmem>>, vector<4x8xf32>
    tpu.vector_store %arg16[%c4_123, %c0_124], %141 {strides = array<i32>} : memref<32x8xf32, #tpu.memory_space<vmem>>, vector<4x8xf32>,
    %c16_125 = arith.constant 16 : index
    %c0_126 = arith.constant 0 : index
    %143 = vector.load %arg15[%c16_125, %c0_126] : memref<64x8xf32, #tpu.memory_space<vmem>>, vector<4x8xf32>
    %c20 = arith.constant 20 : index
    %c0_127 = arith.constant 0 : index
    %144 = vector.load %arg15[%c20, %c0_127] : memref<64x8xf32, #tpu.memory_space<vmem>>, vector<4x8xf32>
    %145 = arith.addf %143, %144 : vector<4x8xf32>
    %c8_128 = arith.constant 8 : index
    %c0_129 = arith.constant 0 : index
    %146 = vector.load %arg16[%c8_128, %c0_129] : memref<32x8xf32, #tpu.memory_space<vmem>>, vector<4x8xf32>
    tpu.vector_store %arg16[%c8_128, %c0_129], %145 {strides = array<i32>} : memref<32x8xf32, #tpu.memory_space<vmem>>, vector<4x8xf32>,
    %c24_130 = arith.constant 24 : index
    %c0_131 = arith.constant 0 : index
    %147 = vector.load %arg15[%c24_130, %c0_131] : memref<64x8xf32, #tpu.memory_space<vmem>>, vector<4x8xf32>
    %c28 = arith.constant 28 : index
    %c0_132 = arith.constant 0 : index
    %148 = vector.load %arg15[%c28, %c0_132] : memref<64x8xf32, #tpu.memory_space<vmem>>, vector<4x8xf32>
    %149 = arith.addf %147, %148 : vector<4x8xf32>
    %c12_133 = arith.constant 12 : index
    %c0_134 = arith.constant 0 : index
    %150 = vector.load %arg16[%c12_133, %c0_134] : memref<32x8xf32, #tpu.memory_space<vmem>>, vector<4x8xf32>
    tpu.vector_store %arg16[%c12_133, %c0_134], %149 {strides = array<i32>} : memref<32x8xf32, #tpu.memory_space<vmem>>, vector<4x8xf32>,
    %c32_135 = arith.constant 32 : index
    %c0_136 = arith.constant 0 : index
    %151 = vector.load %arg15[%c32_135, %c0_136] : memref<64x8xf32, #tpu.memory_space<vmem>>, vector<4x8xf32>
    %c36 = arith.constant 36 : index
    %c0_137 = arith.constant 0 : index
    %152 = vector.load %arg15[%c36, %c0_137] : memref<64x8xf32, #tpu.memory_space<vmem>>, vector<4x8xf32>
    %153 = arith.addf %151, %152 : vector<4x8xf32>
    %c16_138 = arith.constant 16 : index
    %c0_139 = arith.constant 0 : index
    %154 = vector.load %arg16[%c16_138, %c0_139] : memref<32x8xf32, #tpu.memory_space<vmem>>, vector<4x8xf32>
    tpu.vector_store %arg16[%c16_138, %c0_139], %153 {strides = array<i32>} : memref<32x8xf32, #tpu.memory_space<vmem>>, vector<4x8xf32>,
    %c40_140 = arith.constant 40 : index
    %c0_141 = arith.constant 0 : index
    %155 = vector.load %arg15[%c40_140, %c0_141] : memref<64x8xf32, #tpu.memory_space<vmem>>, vector<4x8xf32>
    %c44 = arith.constant 44 : index
    %c0_142 = arith.constant 0 : index
    %156 = vector.load %arg15[%c44, %c0_142] : memref<64x8xf32, #tpu.memory_space<vmem>>, vector<4x8xf32>
    %157 = arith.addf %155, %156 : vector<4x8xf32>
    %c20_143 = arith.constant 20 : index
    %c0_144 = arith.constant 0 : index
    %158 = vector.load %arg16[%c20_143, %c0_144] : memref<32x8xf32, #tpu.memory_space<vmem>>, vector<4x8xf32>
    tpu.vector_store %arg16[%c20_143, %c0_144], %157 {strides = array<i32>} : memref<32x8xf32, #tpu.memory_space<vmem>>, vector<4x8xf32>,
    %c48_145 = arith.constant 48 : index
    %c0_146 = arith.constant 0 : index
    %159 = vector.load %arg15[%c48_145, %c0_146] : memref<64x8xf32, #tpu.memory_space<vmem>>, vector<4x8xf32>
    %c52 = arith.constant 52 : index
    %c0_147 = arith.constant 0 : index
    %160 = vector.load %arg15[%c52, %c0_147] : memref<64x8xf32, #tpu.memory_space<vmem>>, vector<4x8xf32>
    %161 = arith.addf %159, %160 : vector<4x8xf32>
    %c24_148 = arith.constant 24 : index
    %c0_149 = arith.constant 0 : index
    %162 = vector.load %arg16[%c24_148, %c0_149] : memref<32x8xf32, #tpu.memory_space<vmem>>, vector<4x8xf32>
    tpu.vector_store %arg16[%c24_148, %c0_149], %161 {strides = array<i32>} : memref<32x8xf32, #tpu.memory_space<vmem>>, vector<4x8xf32>,
    %c56_150 = arith.constant 56 : index
    %c0_151 = arith.constant 0 : index
    %163 = vector.load %arg15[%c56_150, %c0_151] : memref<64x8xf32, #tpu.memory_space<vmem>>, vector<4x8xf32>
    %c60 = arith.constant 60 : index
    %c0_152 = arith.constant 0 : index
    %164 = vector.load %arg15[%c60, %c0_152] : memref<64x8xf32, #tpu.memory_space<vmem>>, vector<4x8xf32>
    %165 = arith.addf %163, %164 : vector<4x8xf32>
    %c28_153 = arith.constant 28 : index
    %c0_154 = arith.constant 0 : index
    %166 = vector.load %arg16[%c28_153, %c0_154] : memref<32x8xf32, #tpu.memory_space<vmem>>, vector<4x8xf32>
    tpu.vector_store %arg16[%c28_153, %c0_154], %165 {strides = array<i32>} : memref<32x8xf32, #tpu.memory_space<vmem>>, vector<4x8xf32>,
    %c0_155 = arith.constant 0 : index
    %c0_156 = arith.constant 0 : index
    %167 = vector.load %arg16[%c0_155, %c0_156] : memref<32x8xf32, #tpu.memory_space<vmem>>, vector<32x8xf32>
    %168 = vector.broadcast %130 : vector<1x8xf32> to vector<32x8xf32>
    %169 = arith.mulf %167, %168 : vector<32x8xf32>
    %c0_157 = arith.constant 0 : index
    %c0_158 = arith.constant 0 : index
    %170 = vector.load %arg7[%c0_157, %c0_158] : memref<8x16xf32, #tpu.memory_space<vmem>>, vector<8x16xf32>
    %cst_159 = arith.constant dense<0.000000e+00> : vector<32x16xf32>
    %171 = tpu.matmul %169, %170, %cst_159 {dimension_numbers = #tpu.dot_dimension_numbers<[1], [0], [0], [1], [0, 0, 1, 1], [], []>} : vector<32x8xf32>, vector<8x16xf32>, vector<32x16xf32> -> vector<32x16xf32>
    %172 = vector.broadcast %128 : vector<1x16xf32> to vector<32x16xf32>
    %173 = arith.addf %171, %172 : vector<32x16xf32>
    %c0_160 = arith.constant 0 : index
    %c0_161 = arith.constant 0 : index
    %174 = vector.load %arg9[%c0_160, %c0_161] : memref<16x16xf32, #tpu.memory_space<vmem>>, vector<16x16xf32>
    %175 = vector.extract_strided_slice %173 {offsets = [0, 0], sizes = [16, 16], strides = [1, 1]} : vector<32x16xf32> to vector<16x16xf32>
    %176 = arith.mulf %175, %174 : vector<16x16xf32>
    %cst_162 = arith.constant dense<0.000000e+00> : vector<16xf32>
    %177 = vector.multi_reduction <add>, %176, %cst_162 [1] : vector<16x16xf32> to vector<16xf32>
    %178 = vector.shape_cast %177 : vector<16xf32> to vector<16x1xf32>
    %cst_163 = arith.constant dense<0.000000e+00> : vector<1xf32>
    %179 = vector.multi_reduction <add>, %178, %cst_163 [0] : vector<16x1xf32> to vector<1xf32>
    %180 = vector.shape_cast %179 : vector<1xf32> to vector<1x1xf32>
    %c0_164 = arith.constant 0 : index
    %c0_165 = arith.constant 0 : index
    %181 = vector.load %arg10[%c0_164, %c0_165] : memref<1x1xf32, #tpu.memory_space<vmem>>, vector<1x1xf32>
    %182 = arith.addf %180, %181 : vector<1x1xf32>
    %c0_166 = arith.constant 0 : index
    %c0_167 = arith.constant 0 : index
    %183 = vector.load %arg11[%c0_166, %c0_167] : memref<2x1xf32, #tpu.memory_space<vmem>>, vector<1x1xf32>
    tpu.vector_store %arg11[%c0_166, %c0_167], %182 {strides = array<i32>} : memref<2x1xf32, #tpu.memory_space<vmem>>, vector<1x1xf32>,
    %184 = vector.extract_strided_slice %173 {offsets = [16, 0], sizes = [16, 16], strides = [1, 1]} : vector<32x16xf32> to vector<16x16xf32>
    %185 = arith.mulf %184, %174 : vector<16x16xf32>
    %cst_168 = arith.constant dense<0.000000e+00> : vector<16xf32>
    %186 = vector.multi_reduction <add>, %185, %cst_168 [1] : vector<16x16xf32> to vector<16xf32>
    %187 = vector.shape_cast %186 : vector<16xf32> to vector<16x1xf32>
    %cst_169 = arith.constant dense<0.000000e+00> : vector<1xf32>
    %188 = vector.multi_reduction <add>, %187, %cst_169 [0] : vector<16x1xf32> to vector<1xf32>
    %189 = vector.shape_cast %188 : vector<1xf32> to vector<1x1xf32>
    %c0_170 = arith.constant 0 : index
    %c0_171 = arith.constant 0 : index
    %190 = vector.load %arg10[%c0_170, %c0_171] : memref<1x1xf32, #tpu.memory_space<vmem>>, vector<1x1xf32>
    %191 = arith.addf %189, %190 : vector<1x1xf32>
    %c1_172 = arith.constant 1 : index
    %c0_173 = arith.constant 0 : index
    %192 = vector.load %arg11[%c1_172, %c0_173] : memref<2x1xf32, #tpu.memory_space<vmem>>, vector<1x1xf32>
    tpu.vector_store %arg11[%c1_172, %c0_173], %191 {strides = array<i32>} : memref<2x1xf32, #tpu.memory_space<vmem>>, vector<1x1xf32>,
    return
  }
}

</mosaic_0001>

<llo_original>
// kernel: tpu_custom_call.1
$region0: #{tpu_custom_call.1}
  #allocation0 [shape = 'u32[]', space=smem, size = 0x4, offset = 0x4, fixed_abs, tag = 'smem constant byte address 0x4 - core index']
  #allocation1 [shape = 'u32[144,128]{1,0:T(1,128)}', space=vmem, size = 0x12000, scoped, tag = 'internal scratch']
  #allocation2 [shape = 'f32[256,4]{1,0:T(8,128)}', space=vmem, size = 0x20000, scoped, tag = 'scratch operand']
  #allocation3 [shape = 'f32[128,4]{1,0:T(8,128)}', space=vmem, size = 0x10000, scoped, tag = 'scratch operand']
  #allocation4 [shape = 'f32[128,8]{1,0:T(8,128)}', space=vmem, size = 0x10000, scoped, tag = 'scratch operand']
  #allocation5 [shape = 'f32[64,8]{1,0:T(8,128)}', space=vmem, size = 0x8000, scoped, tag = 'scratch operand']
  #allocation6 [shape = 'f32[32,8]{1,0:T(8,128)}', space=vmem, size = 0x4000, scoped, tag = 'scratch operand']
  #allocation7 [shape = 'f32[1,1]{1,0:T(1,128)S(1)}', space=vmem, size = 0x200, scoped, tag = 'scoped memory for tpu_custom_call.1']
  %s0 = inlined_call_operand.vmem [shape: f32[512,4], index: 0, kind: input, shape index: {}]
  %s1 = inlined_call_operand.vmem [shape: f32[1,4], index: 1, kind: input, shape index: {}]
  %s2 = inlined_call_operand.vmem [shape: f32[1,4], index: 2, kind: input, shape index: {}]
  %s3 = inlined_call_operand.vmem [shape: f32[4,8], index: 3, kind: input, shape index: {}]
  %s4 = inlined_call_operand.vmem [shape: f32[1,8], index: 4, kind: input, shape index: {}]
  %s5 = inlined_call_operand.vmem [shape: f32[1,8], index: 5, kind: input, shape index: {}]
  %s6 = inlined_call_operand.vmem [shape: f32[1,8], index: 6, kind: input, shape index: {}]
  %s7 = inlined_call_operand.vmem [shape: f32[8,16], index: 7, kind: input, shape index: {}]
  %s8 = inlined_call_operand.vmem [shape: f32[1,16], index: 8, kind: input, shape index: {}]
  %s9 = inlined_call_operand.vmem [shape: f32[16,16], index: 9, kind: input, shape index: {}]
  %s10 = inlined_call_operand.<no memory space> [shape: f32[1,1], index: 10, kind: input, shape index: {}]
  %s11 = inlined_call_operand.vmem [shape: f32[2,1], index: 11, kind: output, shape index: {}]
  %s12 = sld [smem:[#allocation0]]
  $region54: #{tpu_custom_call.1} parent=0
    _
  %s14 = ssub.s32 1, %s12
  %s15 = scalar_select 0, %s14, %s12
  %v16 = vstv %s10
  %17 = vst [vmem:[#allocation7] sm:$0x1] %v16
  // Predicated region
  $region2: #{tpu_custom_call.1} parent=0 // pred_check
    _
  $region3: #{tpu_custom_call.1} parent=0 // pred_check_branch
    %19 = sbr.rel (0) target = $region5
  $region4: #{tpu_custom_call.1} parent=0 // pred_region
    _
  $region5: #{tpu_custom_call.1} parent=0 // pred_fallthru
    _
  // Predicated region
  $region6: #{tpu_custom_call.1} parent=0 // pred_check
    _
  $region7: #{tpu_custom_call.1} parent=0 // pred_check_branch
    %21 = sbr.rel (0) target = $region9
  $region8: #{tpu_custom_call.1} parent=0 // pred_region
    _
  $region9: #{tpu_custom_call.1} parent=0 // pred_fallthru
    _
  // Predicated region
  $region10: #{tpu_custom_call.1} parent=0 // pred_check
    _
  $region11: #{tpu_custom_call.1} parent=0 // pred_check_branch
    %23 = sbr.rel (0) target = $region13
  $region12: #{tpu_custom_call.1} parent=0 // pred_region
    _
  $region13: #{tpu_custom_call.1} parent=0 // pred_fallthru
    _
  // Predicated region
  $region14: #{tpu_custom_call.1} parent=0 // pred_check
    _
  $region15: #{tpu_custom_call.1} parent=0 // pred_check_branch
    %25 = sbr.rel (0) target = $region17
  $region16: #{tpu_custom_call.1} parent=0 // pred_region
    _
  $region17: #{tpu_custom_call.1} parent=0 // pred_fallthru
    _
  // Predicated region
  $region18: #{tpu_custom_call.1} parent=0 // pred_check
    _
  $region19: #{tpu_custom_call.1} parent=0 // pred_check_branch
    %27 = sbr.rel (0) target = $region21
  $region20: #{tpu_custom_call.1} parent=0 // pred_region
    _
  $region21: #{tpu_custom_call.1} parent=0 // pred_fallthru
    _
  // Predicated region
  $region22: #{tpu_custom_call.1} parent=0 // pred_check
    _
  $region23: #{tpu_custom_call.1} parent=0 // pred_check_branch
    %29 = sbr.rel (0) target = $region25
  $region24: #{tpu_custom_call.1} parent=0 // pred_region
    _
  $region25: #{tpu_custom_call.1} parent=0 // pred_fallthru
    _
  // Predicated region
  $region26: #{tpu_custom_call.1} parent=0 // pred_check
    _
  $region27: #{tpu_custom_call.1} parent=0 // pred_check_branch
    %31 = sbr.rel (0) target = $region29
  $region28: #{tpu_custom_call.1} parent=0 // pred_region
    _
  $region29: #{tpu_custom_call.1} parent=0 // pred_fallthru
    _
  // Predicated region
  $region30: #{tpu_custom_call.1} parent=0 // pred_check
    _
  $region31: #{tpu_custom_call.1} parent=0 // pred_check_branch
    %33 = sbr.rel (0) target = $region33
  $region32: #{tpu_custom_call.1} parent=0 // pred_region
    _
  $region33: #{tpu_custom_call.1} parent=0 // pred_fallthru
    _
  // Predicated region
  $region34: #{tpu_custom_call.1} parent=0 // pred_check
    _
  $region35: #{tpu_custom_call.1} parent=0 // pred_check_branch
    %35 = sbr.rel (0) target = $region37
  $region36: #{tpu_custom_call.1} parent=0 // pred_region
    _
  $region37: #{tpu_custom_call.1} parent=0 // pred_fallthru
    _
  // Predicated region
  $region38: #{tpu_custom_call.1} parent=0 // pred_check
    _
  $region39: #{tpu_custom_call.1} parent=0 // pred_check_branch
    %37 = sbr.rel (0) target = $region41
  $region40: #{tpu_custom_call.1} parent=0 // pred_region
    _
  $region41: #{tpu_custom_call.1} parent=0 // pred_fallthru
    _
  // Predicated region
  $region42: #{tpu_custom_call.1} parent=0 // pred_check
    _
  $region43: #{tpu_custom_call.1} parent=0 // pred_check_branch
    %39 = sbr.rel (0) target = $region45
  $region44: #{tpu_custom_call.1} parent=0 // pred_region
    _
  $region45: #{tpu_custom_call.1} parent=0 // pred_fallthru
    _
  %v40 = vld [vmem:[%s0] sm:$0xff]
  %v41 = vld [vmem:[%s0 + $0x8] sm:$0xff]
  %v42 = vld [vmem:[%s0 + $0x10] sm:$0xff]
  %v43 = vld [vmem:[%s0 + $0x18] sm:$0xff]
  %v44 = vld [vmem:[%s0 + $0x20] sm:$0xff]
  %v45 = vld [vmem:[%s0 + $0x28] sm:$0xff]
  %v46 = vld [vmem:[%s0 + $0x30] sm:$0xff]
  %v47 = vld [vmem:[%s0 + $0x38] sm:$0xff]
  %v48 = vld [vmem:[%s0 + $0x40] sm:$0xff]
  %v49 = vld [vmem:[%s0 + $0x48] sm:$0xff]
  %v50 = vld [vmem:[%s0 + $0x50] sm:$0xff]
  %v51 = vld [vmem:[%s0 + $0x58] sm:$0xff]
  %v52 = vld [vmem:[%s0 + $0x60] sm:$0xff]
  %v53 = vld [vmem:[%s0 + $0x68] sm:$0xff]
  %v54 = vld [vmem:[%s0 + $0x70] sm:$0xff]
  %v55 = vld [vmem:[%s0 + $0x78] sm:$0xff]
  %v56 = vld [vmem:[%s0 + $0x80] sm:$0xff]
  %v57 = vld [vmem:[%s0 + $0x88] sm:$0xff]
  %v58 = vld [vmem:[%s0 + $0x90] sm:$0xff]
  %v59 = vld [vmem:[%s0 + $0x98] sm:$0xff]
  %v60 = vld [vmem:[%s0 + $0xa0] sm:$0xff]
  %v61 = vld [vmem:[%s0 + $0xa8] sm:$0xff]
  %v62 = vld [vmem:[%s0 + $0xb0] sm:$0xff]
  %v63 = vld [vmem:[%s0 + $0xb8] sm:$0xff]
  %v64 = vld [vmem:[%s0 + $0xc0] sm:$0xff]
  %v65 = vld [vmem:[%s0 + $0xc8] sm:$0xff]
  %v66 = vld [vmem:[%s0 + $0xd0] sm:$0xff]
  %v67 = vld [vmem:[%s0 + $0xd8] sm:$0xff]
  %v68 = vld [vmem:[%s0 + $0xe0] sm:$0xff]
  %v69 = vld [vmem:[%s0 + $0xe8] sm:$0xff]
  %v70 = vld [vmem:[%s0 + $0xf0] sm:$0xff]
  %v71 = vld [vmem:[%s0 + $0xf8] sm:$0xff]
  %v72 = vld [vmem:[%s0 + $0x100] sm:$0xff]
  %v73 = vld [vmem:[%s0 + $0x108] sm:$0xff]
  %v74 = vld [vmem:[%s0 + $0x110] sm:$0xff]
  %v75 = vld [vmem:[%s0 + $0x118] sm:$0xff]
  %v76 = vld [vmem:[%s0 + $0x120] sm:$0xff]
  %v77 = vld [vmem:[%s0 + $0x128] sm:$0xff]
  %v78 = vld [vmem:[%s0 + $0x130] sm:$0xff]
  %v79 = vld [vmem:[%s0 + $0x138] sm:$0xff]
  %v80 = vld [vmem:[%s0 + $0x140] sm:$0xff]
  %v81 = vld [vmem:[%s0 + $0x148] sm:$0xff]
  %v82 = vld [vmem:[%s0 + $0x150] sm:$0xff]
  %v83 = vld [vmem:[%s0 + $0x158] sm:$0xff]
  %v84 = vld [vmem:[%s0 + $0x160] sm:$0xff]
  %v85 = vld [vmem:[%s0 + $0x168] sm:$0xff]
  %v86 = vld [vmem:[%s0 + $0x170] sm:$0xff]
  %v87 = vld [vmem:[%s0 + $0x178] sm:$0xff]
  %v88 = vld [vmem:[%s0 + $0x180] sm:$0xff]
  %v89 = vld [vmem:[%s0 + $0x188] sm:$0xff]
  %v90 = vld [vmem:[%s0 + $0x190] sm:$0xff]
  %v91 = vld [vmem:[%s0 + $0x198] sm:$0xff]
  %v92 = vld [vmem:[%s0 + $0x1a0] sm:$0xff]
  %v93 = vld [vmem:[%s0 + $0x1a8] sm:$0xff]
  %v94 = vld [vmem:[%s0 + $0x1b0] sm:$0xff]
  %v95 = vld [vmem:[%s0 + $0x1b8] sm:$0xff]
  %v96 = vld [vmem:[%s0 + $0x1c0] sm:$0xff]
  %v97 = vld [vmem:[%s0 + $0x1c8] sm:$0xff]
  %v98 = vld [vmem:[%s0 + $0x1d0] sm:$0xff]
  %v99 = vld [vmem:[%s0 + $0x1d8] sm:$0xff]
  %v100 = vld [vmem:[%s0 + $0x1e0] sm:$0xff]
  %v101 = vld [vmem:[%s0 + $0x1e8] sm:$0xff]
  %v102 = vld [vmem:[%s0 + $0x1f0] sm:$0xff]
  %v103 = vld [vmem:[%s0 + $0x1f8] sm:$0xff]
  %vm104 = vcmask 31744
  %v105 = vsel %vm104, %v40, 0.0
  %v106 = vsel %vm104, %v41, 0.0
  %v107 = vadd.f32 %v105, %v106
  %v108 = vsel %vm104, %v42, 0.0
  %v109 = vadd.f32 %v107, %v108
  %v110 = vsel %vm104, %v43, 0.0
  %v111 = vadd.f32 %v109, %v110
  %v112 = vsel %vm104, %v44, 0.0
  %v113 = vadd.f32 %v111, %v112
  %v114 = vsel %vm104, %v45, 0.0
  %v115 = vadd.f32 %v113, %v114
  %v116 = vsel %vm104, %v46, 0.0
  %v117 = vadd.f32 %v115, %v116
  %v118 = vsel %vm104, %v47, 0.0
  %v119 = vadd.f32 %v117, %v118
  %v120 = vsel %vm104, %v48, 0.0
  %v121 = vadd.f32 %v119, %v120
  %v122 = vsel %vm104, %v49, 0.0
  %v123 = vadd.f32 %v121, %v122
  %v124 = vsel %vm104, %v50, 0.0
  %v125 = vadd.f32 %v123, %v124
  %v126 = vsel %vm104, %v51, 0.0
  %v127 = vadd.f32 %v125, %v126
  %v128 = vsel %vm104, %v52, 0.0
  %v129 = vadd.f32 %v127, %v128
  %v130 = vsel %vm104, %v53, 0.0
  %v131 = vadd.f32 %v129, %v130
  %v132 = vsel %vm104, %v54, 0.0
  %v133 = vadd.f32 %v131, %v132
  %v134 = vsel %vm104, %v55, 0.0
  %v135 = vadd.f32 %v133, %v134
  %v136 = vsel %vm104, %v56, 0.0
  %v137 = vadd.f32 %v135, %v136
  %v138 = vsel %vm104, %v57, 0.0
  %v139 = vadd.f32 %v137, %v138
  %v140 = vsel %vm104, %v58, 0.0
  %v141 = vadd.f32 %v139, %v140
  %v142 = vsel %vm104, %v59, 0.0
  %v143 = vadd.f32 %v141, %v142
  %v144 = vsel %vm104, %v60, 0.0
  %v145 = vadd.f32 %v143, %v144
  %v146 = vsel %vm104, %v61, 0.0
  %v147 = vadd.f32 %v145, %v146
  %v148 = vsel %vm104, %v62, 0.0
  %v149 = vadd.f32 %v147, %v148
  %v150 = vsel %vm104, %v63, 0.0
  %v151 = vadd.f32 %v149, %v150
  %v152 = vsel %vm104, %v64, 0.0
  %v153 = vadd.f32 %v151, %v152
  %v154 = vsel %vm104, %v65, 0.0
  %v155 = vadd.f32 %v153, %v154
  %v156 = vsel %vm104, %v66, 0.0
  %v157 = vadd.f32 %v155, %v156
  %v158 = vsel %vm104, %v67, 0.0
  %v159 = vadd.f32 %v157, %v158
  %v160 = vsel %vm104, %v68, 0.0
  %v161 = vadd.f32 %v159, %v160
  %v162 = vsel %vm104, %v69, 0.0
  %v163 = vadd.f32 %v161, %v162
  %v164 = vsel %vm104, %v70, 0.0
  %v165 = vadd.f32 %v163, %v164
  %v166 = vsel %vm104, %v71, 0.0
  %v167 = vadd.f32 %v165, %v166
  %v168 = vsel %vm104, %v72, 0.0
  %v169 = vadd.f32 %v167, %v168
  %v170 = vsel %vm104, %v73, 0.0
  %v171 = vadd.f32 %v169, %v170
  %v172 = vsel %vm104, %v74, 0.0
  %v173 = vadd.f32 %v171, %v172
  %v174 = vsel %vm104, %v75, 0.0
  %v175 = vadd.f32 %v173, %v174
  %v176 = vsel %vm104, %v76, 0.0
  %v177 = vadd.f32 %v175, %v176
  %v178 = vsel %vm104, %v77, 0.0
  %v179 = vadd.f32 %v177, %v178
  %v180 = vsel %vm104, %v78, 0.0
  %v181 = vadd.f32 %v179, %v180
  %v182 = vsel %vm104, %v79, 0.0
  %v183 = vadd.f32 %v181, %v182
  %v184 = vsel %vm104, %v80, 0.0
  %v185 = vadd.f32 %v183, %v184
  %v186 = vsel %vm104, %v81, 0.0
  %v187 = vadd.f32 %v185, %v186
  %v188 = vsel %vm104, %v82, 0.0
  %v189 = vadd.f32 %v187, %v188
  %v190 = vsel %vm104, %v83, 0.0
  %v191 = vadd.f32 %v189, %v190
  %v192 = vsel %vm104, %v84, 0.0
  %v193 = vadd.f32 %v191, %v192
  %v194 = vsel %vm104, %v85, 0.0
  %v195 = vadd.f32 %v193, %v194
  %v196 = vsel %vm104, %v86, 0.0
  %v197 = vadd.f32 %v195, %v196
  %v198 = vsel %vm104, %v87, 0.0
  %v199 = vadd.f32 %v197, %v198
  %v200 = vsel %vm104, %v88, 0.0
  %v201 = vadd.f32 %v199, %v200
  %v202 = vsel %vm104, %v89, 0.0
  %v203 = vadd.f32 %v201, %v202
  %v204 = vsel %vm104, %v90, 0.0
  %v205 = vadd.f32 %v203, %v204
  %v206 = vsel %vm104, %v91, 0.0
  %v207 = vadd.f32 %v205, %v206
  %v208 = vsel %vm104, %v92, 0.0
  %v209 = vadd.f32 %v207, %v208
  %v210 = vsel %vm104, %v93, 0.0
  %v211 = vadd.f32 %v209, %v210
  %v212 = vsel %vm104, %v94, 0.0
  %v213 = vadd.f32 %v211, %v212
  %v214 = vsel %vm104, %v95, 0.0
  %v215 = vadd.f32 %v213, %v214
  %v216 = vsel %vm104, %v96, 0.0
  %v217 = vadd.f32 %v215, %v216
  %v218 = vsel %vm104, %v97, 0.0
  %v219 = vadd.f32 %v217, %v218
  %v220 = vsel %vm104, %v98, 0.0
  %v221 = vadd.f32 %v219, %v220
  %v222 = vsel %vm104, %v99, 0.0
  %v223 = vadd.f32 %v221, %v222
  %v224 = vsel %vm104, %v100, 0.0
  %v225 = vadd.f32 %v223, %v224
  %v226 = vsel %vm104, %v101, 0.0
  %v227 = vadd.f32 %v225, %v226
  %v228 = vsel %vm104, %v102, 0.0
  %v229 = vadd.f32 %v227, %v228
  %v230 = vsel %vm104, %v103, 0.0
  %v231 = vadd.f32 %v229, %v230
  %v232 = vrot.slane %v231, 4
  %v233 = vadd.f32 %v231, %v232
  %v234 = vrot.slane %v233, 2
  %v235 = vadd.f32 %v233, %v234
  %v236 = vrot.slane %v235, 1
  %v237 = vadd.f32 %v235, %v236
  %v238 = vmul.f32 %v40, %v40
  %v239 = vmul.f32 %v41, %v41
  %v240 = vmul.f32 %v42, %v42
  %v241 = vmul.f32 %v43, %v43
  %v242 = vmul.f32 %v44, %v44
  %v243 = vmul.f32 %v45, %v45
  %v244 = vmul.f32 %v46, %v46
  %v245 = vmul.f32 %v47, %v47
  %v246 = vmul.f32 %v48, %v48
  %v247 = vmul.f32 %v49, %v49
  %v248 = vmul.f32 %v50, %v50
  %v249 = vmul.f32 %v51, %v51
  %v250 = vmul.f32 %v52, %v52
  %v251 = vmul.f32 %v53, %v53
  %v252 = vmul.f32 %v54, %v54
  %v253 = vmul.f32 %v55, %v55
  %v254 = vmul.f32 %v56, %v56
  %v255 = vmul.f32 %v57, %v57
  %v256 = vmul.f32 %v58, %v58
  %v257 = vmul.f32 %v59, %v59
  %v258 = vmul.f32 %v60, %v60
  %v259 = vmul.f32 %v61, %v61
  %v260 = vmul.f32 %v62, %v62
  %v261 = vmul.f32 %v63, %v63
  %v262 = vmul.f32 %v64, %v64
  %v263 = vmul.f32 %v65, %v65
  %v264 = vmul.f32 %v66, %v66
  %v265 = vmul.f32 %v67, %v67
  %v266 = vmul.f32 %v68, %v68
  %v267 = vmul.f32 %v69, %v69
  %v268 = vmul.f32 %v70, %v70
  %v269 = vmul.f32 %v71, %v71
  %v270 = vmul.f32 %v72, %v72
  %v271 = vmul.f32 %v73, %v73
  %v272 = vmul.f32 %v74, %v74
  %v273 = vmul.f32 %v75, %v75
  %v274 = vmul.f32 %v76, %v76
  %v275 = vmul.f32 %v77, %v77
  %v276 = vmul.f32 %v78, %v78
  %v277 = vmul.f32 %v79, %v79
  %v278 = vmul.f32 %v80, %v80
  %v279 = vmul.f32 %v81, %v81
  %v280 = vmul.f32 %v82, %v82
  %v281 = vmul.f32 %v83, %v83
  %v282 = vmul.f32 %v84, %v84
  %v283 = vmul.f32 %v85, %v85
  %v284 = vmul.f32 %v86, %v86
  %v285 = vmul.f32 %v87, %v87
  %v286 = vmul.f32 %v88, %v88
  %v287 = vmul.f32 %v89, %v89
  %v288 = vmul.f32 %v90, %v90
  %v289 = vmul.f32 %v91, %v91
  %v290 = vmul.f32 %v92, %v92
  %v291 = vmul.f32 %v93, %v93
  %v292 = vmul.f32 %v94, %v94
  %v293 = vmul.f32 %v95, %v95
  %v294 = vmul.f32 %v96, %v96
  %v295 = vmul.f32 %v97, %v97
  %v296 = vmul.f32 %v98, %v98
  %v297 = vmul.f32 %v99, %v99
  %v298 = vmul.f32 %v100, %v100
  %v299 = vmul.f32 %v101, %v101
  %v300 = vmul.f32 %v102, %v102
  %v301 = vmul.f32 %v103, %v103
  %v302 = vsel %vm104, %v238, 0.0
  %v303 = vsel %vm104, %v239, 0.0
  %v304 = vadd.f32 %v302, %v303
  %v305 = vsel %vm104, %v240, 0.0
  %v306 = vadd.f32 %v304, %v305
  %v307 = vsel %vm104, %v241, 0.0
  %v308 = vadd.f32 %v306, %v307
  %v309 = vsel %vm104, %v242, 0.0
  %v310 = vadd.f32 %v308, %v309
  %v311 = vsel %vm104, %v243, 0.0
  %v312 = vadd.f32 %v310, %v311
  %v313 = vsel %vm104, %v244, 0.0
  %v314 = vadd.f32 %v312, %v313
  %v315 = vsel %vm104, %v245, 0.0
  %v316 = vadd.f32 %v314, %v315
  %v317 = vsel %vm104, %v246, 0.0
  %v318 = vadd.f32 %v316, %v317
  %v319 = vsel %vm104, %v247, 0.0
  %v320 = vadd.f32 %v318, %v319
  %v321 = vsel %vm104, %v248, 0.0
  %v322 = vadd.f32 %v320, %v321
  %v323 = vsel %vm104, %v249, 0.0
  %v324 = vadd.f32 %v322, %v323
  %v325 = vsel %vm104, %v250, 0.0
  %v326 = vadd.f32 %v324, %v325
  %v327 = vsel %vm104, %v251, 0.0
  %v328 = vadd.f32 %v326, %v327
  %v329 = vsel %vm104, %v252, 0.0
  %v330 = vadd.f32 %v328, %v329
  %v331 = vsel %vm104, %v253, 0.0
  %v332 = vadd.f32 %v330, %v331
  %v333 = vsel %vm104, %v254, 0.0
  %v334 = vadd.f32 %v332, %v333
  %v335 = vsel %vm104, %v255, 0.0
  %v336 = vadd.f32 %v334, %v335
  %v337 = vsel %vm104, %v256, 0.0
  %v338 = vadd.f32 %v336, %v337
  %v339 = vsel %vm104, %v257, 0.0
  %v340 = vadd.f32 %v338, %v339
  %v341 = vsel %vm104, %v258, 0.0
  %v342 = vadd.f32 %v340, %v341
  %v343 = vsel %vm104, %v259, 0.0
  %v344 = vadd.f32 %v342, %v343
  %v345 = vsel %vm104, %v260, 0.0
  %v346 = vadd.f32 %v344, %v345
  %v347 = vsel %vm104, %v261, 0.0
  %v348 = vadd.f32 %v346, %v347
  %v349 = vsel %vm104, %v262, 0.0
  %v350 = vadd.f32 %v348, %v349
  %v351 = vsel %vm104, %v263, 0.0
  %v352 = vadd.f32 %v350, %v351
  %v353 = vsel %vm104, %v264, 0.0
  %v354 = vadd.f32 %v352, %v353
  %v355 = vsel %vm104, %v265, 0.0
  %v356 = vadd.f32 %v354, %v355
  %v357 = vsel %vm104, %v266, 0.0
  %v358 = vadd.f32 %v356, %v357
  %v359 = vsel %vm104, %v267, 0.0
  %v360 = vadd.f32 %v358, %v359
  %v361 = vsel %vm104, %v268, 0.0
  %v362 = vadd.f32 %v360, %v361
  %v363 = vsel %vm104, %v269, 0.0
  %v364 = vadd.f32 %v362, %v363
  %v365 = vsel %vm104, %v270, 0.0
  %v366 = vadd.f32 %v364, %v365
  %v367 = vsel %vm104, %v271, 0.0
  %v368 = vadd.f32 %v366, %v367
  %v369 = vsel %vm104, %v272, 0.0
  %v370 = vadd.f32 %v368, %v369
  %v371 = vsel %vm104, %v273, 0.0
  %v372 = vadd.f32 %v370, %v371
  %v373 = vsel %vm104, %v274, 0.0
  %v374 = vadd.f32 %v372, %v373
  %v375 = vsel %vm104, %v275, 0.0
  %v376 = vadd.f32 %v374, %v375
  %v377 = vsel %vm104, %v276, 0.0
  %v378 = vadd.f32 %v376, %v377
  %v379 = vsel %vm104, %v277, 0.0
  %v380 = vadd.f32 %v378, %v379
  %v381 = vsel %vm104, %v278, 0.0
  %v382 = vadd.f32 %v380, %v381
  %v383 = vsel %vm104, %v279, 0.0
  %v384 = vadd.f32 %v382, %v383
  %v385 = vsel %vm104, %v280, 0.0
  %v386 = vadd.f32 %v384, %v385
  %v387 = vsel %vm104, %v281, 0.0
  %v388 = vadd.f32 %v386, %v387
  %v389 = vsel %vm104, %v282, 0.0
  %v390 = vadd.f32 %v388, %v389
  %v391 = vsel %vm104, %v283, 0.0
  %v392 = vadd.f32 %v390, %v391
  %v393 = vsel %vm104, %v284, 0.0
  %v394 = vadd.f32 %v392, %v393
  %v395 = vsel %vm104, %v285, 0.0
  %v396 = vadd.f32 %v394, %v395
  %v397 = vsel %vm104, %v286, 0.0
  %v398 = vadd.f32 %v396, %v397
  %v399 = vsel %vm104, %v287, 0.0
  %v400 = vadd.f32 %v398, %v399
  %v401 = vsel %vm104, %v288, 0.0
  %v402 = vadd.f32 %v400, %v401
  %v403 = vsel %vm104, %v289, 0.0
  %v404 = vadd.f32 %v402, %v403
  %v405 = vsel %vm104, %v290, 0.0
  %v406 = vadd.f32 %v404, %v405
  %v407 = vsel %vm104, %v291, 0.0
  %v408 = vadd.f32 %v406, %v407
  %v409 = vsel %vm104, %v292, 0.0
  %v410 = vadd.f32 %v408, %v409
  %v411 = vsel %vm104, %v293, 0.0
  %v412 = vadd.f32 %v410, %v411
  %v413 = vsel %vm104, %v294, 0.0
  %v414 = vadd.f32 %v412, %v413
  %v415 = vsel %vm104, %v295, 0.0
  %v416 = vadd.f32 %v414, %v415
  %v417 = vsel %vm104, %v296, 0.0
  %v418 = vadd.f32 %v416, %v417
  %v419 = vsel %vm104, %v297, 0.0
  %v420 = vadd.f32 %v418, %v419
  %v421 = vsel %vm104, %v298, 0.0
  %v422 = vadd.f32 %v420, %v421
  %v423 = vsel %vm104, %v299, 0.0
  %v424 = vadd.f32 %v422, %v423
  %v425 = vsel %vm104, %v300, 0.0
  %v426 = vadd.f32 %v424, %v425
  %v427 = vsel %vm104, %v301, 0.0
  %v428 = vadd.f32 %v426, %v427
  %v429 = vrot.slane %v428, 4
  %v430 = vadd.f32 %v428, %v429
  %v431 = vrot.slane %v430, 2
  %v432 = vadd.f32 %v430, %v431
  %v433 = vrot.slane %v432, 1
  %v434 = vadd.f32 %v432, %v433
  %v435 = vmul.f32 %v237, 0.001953125
  %v436 = vmul.f32 %v434, 0.001953125
  %v437 = vmul.f32 %v435, %v435
  %v438 = vsub.f32 %v436, %v437
  %v439 = vmax.f32 %v438, 0.0
  %v440 = vld [vmem:[%s1] sm:$0x1]
  %v441 = vadd.f32 %v439, 1e-05
  %v442 = vrsqrt.pop %v441
  %v443 = vmul.f32 %v440, %v442
  %v444 = vld [vmem:[%s2] sm:$0x1]
  %v445 = vmul.f32 %v435, %v443
  %v446 = vsub.f32 %v444, %v445
  %v447 = vld [vmem:[%s3] sm:$0xf]
  %v448 = vld [vmem:[%s4] sm:$0x1]
  %v450 = vsel %vm104, %v446, 0
  %vm452 = vcmask 1043456
  %v454 = vsel %vm452, %v447, 0
  %456 = vmatprep.subr.mxu0 0.0
  %457 = vmatpush1.msra.mxu0 %v454
  %458 = vmatprep.subr.mxu0 0.0
  %459 = vmatpush1.msra.mxu0 0.0
  %460 = vmatprep.subr.mxu0 0.0
  %461 = vmatpush1.msra.mxu0 0.0
  %462 = vmatprep.subr.mxu0 0.0
  %463 = vmatpush1.msra.mxu0 0.0
  %464 = vmatprep.subr.mxu0 0.0
  %465 = vmatpush1.msra.mxu0 0.0
  %466 = vmatprep.subr.mxu0 0.0
  %467 = vmatpush1.msra.mxu0 0.0
  %468 = vmatprep.subr.mxu0 0.0
  %469 = vmatpush1.msra.mxu0 0.0
  %470 = vmatprep.subr.mxu0 0.0
  %471 = vmatpush1.msra.mxu0 0.0
  %472 = vmatprep.subr.mxu0 0.0
  %473 = vmatpush1.msra.mxu0 0.0
  %474 = vmatprep.subr.mxu0 0.0
  %475 = vmatpush1.msra.mxu0 0.0
  %476 = vmatprep.subr.mxu0 0.0
  %477 = vmatpush1.msra.mxu0 0.0
  %478 = vmatprep.subr.mxu0 0.0
  %479 = vmatpush1.msra.mxu0 0.0
  %480 = vmatprep.subr.mxu0 0.0
  %481 = vmatpush1.msra.mxu0 0.0
  %482 = vmatprep.subr.mxu0 0.0
  %483 = vmatpush1.msra.mxu0 0.0
  %484 = vmatprep.subr.mxu0 0.0
  %485 = vmatpush1.msra.mxu0 0.0
  %486 = vmatprep.subr.mxu0 0.0
  %487 = vmatpush1.msra.mxu0 0.0
  %488 = vmatprep.subr.mxu0 0.0
  %489 = vmatpush1.msra.mxu0 0.0
  %490 = vmatprep.subr.mxu0 0.0
  %491 = vmatpush1.msra.mxu0 0.0
  %492 = vmatprep.subr.mxu0 0.0
  %493 = vmatpush1.msra.mxu0 0.0
  %494 = vmatprep.subr.mxu0 0.0
  %495 = vmatpush1.msra.mxu0 0.0
  %496 = vmatprep.subr.mxu0 0.0
  %497 = vmatpush1.msra.mxu0 0.0
  %498 = vmatprep.subr.mxu0 0.0
  %499 = vmatpush1.msra.mxu0 0.0
  %500 = vmatprep.subr.mxu0 0.0
  %501 = vmatpush1.msra.mxu0 0.0
  %502 = vmatprep.subr.mxu0 0.0
  %503 = vmatpush1.msra.mxu0 0.0
  %504 = vmatprep.subr.mxu0 0.0
  %505 = vmatpush1.msra.mxu0 0.0
  %506 = vmatprep.subr.mxu0 0.0
  %507 = vmatpush1.msra.mxu0 0.0
  %508 = vmatprep.subr.mxu0 0.0
  %509 = vmatpush1.msra.mxu0 0.0
  %510 = vmatprep.subr.mxu0 0.0
  %511 = vmatpush1.msra.mxu0 0.0
  %512 = vmatprep.subr.mxu0 0.0
  %513 = vmatpush1.msra.mxu0 0.0
  %514 = vmatprep.subr.mxu0 0.0
  %515 = vmatpush1.msra.mxu0 0.0
  %516 = vmatprep.subr.mxu0 0.0
  %517 = vmatpush1.msra.mxu0 0.0
  %518 = vmatprep.subr.mxu0 0.0
  %519 = vmatpush1.msra.mxu0 0.0
  %520 = vmatprep.mubr.f32.mxu0 0.0
  %521 = vmatmul.mubr.f32.gmra.mrb[0].mxu0 %v450
  %v522 = vpop.f32.mrb[0].mxu0
  %v523 = vadd.f32 %v448, %v522
  %v524 = vpop.f32.mrb[0].mxu0
  %525 = vdwg.mxu0
  %v526 = vmul.f32 %v443, 0.25
  %v527 = vld [vmem:[%s0] ss:$2 sm:$0xff]
  %s528 = scalar_lea.vmem %s0, 16
  %v529 = vld [vmem:[%s528] ss:$2 sm:$0xff]
  %s530 = scalar_lea.vmem %s0, 32
  %v531 = vld [vmem:[%s530] ss:$2 sm:$0xff]
  %s532 = scalar_lea.vmem %s0, 48
  %v533 = vld [vmem:[%s532] ss:$2 sm:$0xff]
  %s534 = scalar_lea.vmem %s0, 64
  %v535 = vld [vmem:[%s534] ss:$2 sm:$0xff]
  %s536 = scalar_lea.vmem %s0, 80
  %v537 = vld [vmem:[%s536] ss:$2 sm:$0xff]
  %s538 = scalar_lea.vmem %s0, 96
  %v539 = vld [vmem:[%s538] ss:$2 sm:$0xff]
  %s540 = scalar_lea.vmem %s0, 112
  %v541 = vld [vmem:[%s540] ss:$2 sm:$0xff]
  %s542 = scalar_lea.vmem %s0, 128
  %v543 = vld [vmem:[%s542] ss:$2 sm:$0xff]
  %s544 = scalar_lea.vmem %s0, 144
  %v545 = vld [vmem:[%s544] ss:$2 sm:$0xff]
  %s546 = scalar_lea.vmem %s0, 160
  %v547 = vld [vmem:[%s546] ss:$2 sm:$0xff]
  %s548 = scalar_lea.vmem %s0, 176
  %v549 = vld [vmem:[%s548] ss:$2 sm:$0xff]
  %s550 = scalar_lea.vmem %s0, 192
  %v551 = vld [vmem:[%s550] ss:$2 sm:$0xff]
  %s552 = scalar_lea.vmem %s0, 208
  %v553 = vld [vmem:[%s552] ss:$2 sm:$0xff]
  %s554 = scalar_lea.vmem %s0, 224
  %v555 = vld [vmem:[%s554] ss:$2 sm:$0xff]
  %s556 = scalar_lea.vmem %s0, 240
  %v557 = vld [vmem:[%s556] ss:$2 sm:$0xff]
  %s558 = scalar_lea.vmem %s0, 256
  %v559 = vld [vmem:[%s558] ss:$2 sm:$0xff]
  %s560 = scalar_lea.vmem %s0, 272
  %v561 = vld [vmem:[%s560] ss:$2 sm:$0xff]
  %s562 = scalar_lea.vmem %s0, 288
  %v563 = vld [vmem:[%s562] ss:$2 sm:$0xff]
  %s564 = scalar_lea.vmem %s0, 304
  %v565 = vld [vmem:[%s564] ss:$2 sm:$0xff]
  %s566 = scalar_lea.vmem %s0, 320
  %v567 = vld [vmem:[%s566] ss:$2 sm:$0xff]
  %s568 = scalar_lea.vmem %s0, 336
  %v569 = vld [vmem:[%s568] ss:$2 sm:$0xff]
  %s570 = scalar_lea.vmem %s0, 352
  %v571 = vld [vmem:[%s570] ss:$2 sm:$0xff]
  %s572 = scalar_lea.vmem %s0, 368
  %v573 = vld [vmem:[%s572] ss:$2 sm:$0xff]
  %s574 = scalar_lea.vmem %s0, 384
  %v575 = vld [vmem:[%s574] ss:$2 sm:$0xff]
  %s576 = scalar_lea.vmem %s0, 400
  %v577 = vld [vmem:[%s576] ss:$2 sm:$0xff]
  %s578 = scalar_lea.vmem %s0, 416
  %v579 = vld [vmem:[%s578] ss:$2 sm:$0xff]
  %s580 = scalar_lea.vmem %s0, 432
  %v581 = vld [vmem:[%s580] ss:$2 sm:$0xff]
  %s582 = scalar_lea.vmem %s0, 448
  %v583 = vld [vmem:[%s582] ss:$2 sm:$0xff]
  %s584 = scalar_lea.vmem %s0, 464
  %v585 = vld [vmem:[%s584] ss:$2 sm:$0xff]
  %s586 = scalar_lea.vmem %s0, 480
  %v587 = vld [vmem:[%s586] ss:$2 sm:$0xff]
  %s588 = scalar_lea.vmem %s0, 496
  %v589 = vld [vmem:[%s588] ss:$2 sm:$0xff]
  %s590 = scalar_lea.vmem %s0, 1
  %v591 = vld [vmem:[%s590] ss:$2 sm:$0xff]
  %s592 = scalar_lea.vmem %s0, 17
  %v593 = vld [vmem:[%s592] ss:$2 sm:$0xff]
  %s594 = scalar_lea.vmem %s0, 33
  %v595 = vld [vmem:[%s594] ss:$2 sm:$0xff]
  %s596 = scalar_lea.vmem %s0, 49
  %v597 = vld [vmem:[%s596] ss:$2 sm:$0xff]
  %s598 = scalar_lea.vmem %s0, 65
  %v599 = vld [vmem:[%s598] ss:$2 sm:$0xff]
  %s600 = scalar_lea.vmem %s0, 81
  %v601 = vld [vmem:[%s600] ss:$2 sm:$0xff]
  %s602 = scalar_lea.vmem %s0, 97
  %v603 = vld [vmem:[%s602] ss:$2 sm:$0xff]
  %s604 = scalar_lea.vmem %s0, 113
  %v605 = vld [vmem:[%s604] ss:$2 sm:$0xff]
  %s606 = scalar_lea.vmem %s0, 129
  %v607 = vld [vmem:[%s606] ss:$2 sm:$0xff]
  %s608 = scalar_lea.vmem %s0, 145
  %v609 = vld [vmem:[%s608] ss:$2 sm:$0xff]
  %s610 = scalar_lea.vmem %s0, 161
  %v611 = vld [vmem:[%s610] ss:$2 sm:$0xff]
  %s612 = scalar_lea.vmem %s0, 177
  %v613 = vld [vmem:[%s612] ss:$2 sm:$0xff]
  %s614 = scalar_lea.vmem %s0, 193
  %v615 = vld [vmem:[%s614] ss:$2 sm:$0xff]
  %s616 = scalar_lea.vmem %s0, 209
  %v617 = vld [vmem:[%s616] ss:$2 sm:$0xff]
  %s618 = scalar_lea.vmem %s0, 225
  %v619 = vld [vmem:[%s618] ss:$2 sm:$0xff]
  %s620 = scalar_lea.vmem %s0, 241
  %v621 = vld [vmem:[%s620] ss:$2 sm:$0xff]
  %s622 = scalar_lea.vmem %s0, 257
  %v623 = vld [vmem:[%s622] ss:$2 sm:$0xff]
  %s624 = scalar_lea.vmem %s0, 273
  %v625 = vld [vmem:[%s624] ss:$2 sm:$0xff]
  %s626 = scalar_lea.vmem %s0, 289
  %v627 = vld [vmem:[%s626] ss:$2 sm:$0xff]
  %s628 = scalar_lea.vmem %s0, 305
  %v629 = vld [vmem:[%s628] ss:$2 sm:$0xff]
  %s630 = scalar_lea.vmem %s0, 321
  %v631 = vld [vmem:[%s630] ss:$2 sm:$0xff]
  %s632 = scalar_lea.vmem %s0, 337
  %v633 = vld [vmem:[%s632] ss:$2 sm:$0xff]
  %s634 = scalar_lea.vmem %s0, 353
  %v635 = vld [vmem:[%s634] ss:$2 sm:$0xff]
  %s636 = scalar_lea.vmem %s0, 369
  %v637 = vld [vmem:[%s636] ss:$2 sm:$0xff]
  %s638 = scalar_lea.vmem %s0, 385
  %v639 = vld [vmem:[%s638] ss:$2 sm:$0xff]
  %s640 = scalar_lea.vmem %s0, 401
  %v641 = vld [vmem:[%s640] ss:$2 sm:$0xff]
  %s642 = scalar_lea.vmem %s0, 417
  %v643 = vld [vmem:[%s642] ss:$2 sm:$0xff]
  %s644 = scalar_lea.vmem %s0, 433
  %v645 = vld [vmem:[%s644] ss:$2 sm:$0xff]
  %s646 = scalar_lea.vmem %s0, 449
  %v647 = vld [vmem:[%s646] ss:$2 sm:$0xff]
  %s648 = scalar_lea.vmem %s0, 465
  %v649 = vld [vmem:[%s648] ss:$2 sm:$0xff]
  %s650 = scalar_lea.vmem %s0, 481
  %v651 = vld [vmem:[%s650] ss:$2 sm:$0xff]
  %s652 = scalar_lea.vmem %s0, 497
  %v653 = vld [vmem:[%s652] ss:$2 sm:$0xff]
  %v654 = vadd.f32 %v527, %v591
  %v655 = vadd.f32 %v529, %v593
  %v656 = vadd.f32 %v531, %v595
  %v657 = vadd.f32 %v533, %v597
  %v658 = vadd.f32 %v535, %v599
  %v659 = vadd.f32 %v537, %v601
  %v660 = vadd.f32 %v539, %v603
  %v661 = vadd.f32 %v541, %v605
  %v662 = vadd.f32 %v543, %v607
  %v663 = vadd.f32 %v545, %v609
  %v664 = vadd.f32 %v547, %v611
  %v665 = vadd.f32 %v549, %v613
  %v666 = vadd.f32 %v551, %v615
  %v667 = vadd.f32 %v553, %v617
  %v668 = vadd.f32 %v555, %v619
  %v669 = vadd.f32 %v557, %v621
  %v670 = vadd.f32 %v559, %v623
  %v671 = vadd.f32 %v561, %v625
  %v672 = vadd.f32 %v563, %v627
  %v673 = vadd.f32 %v565, %v629
  %v674 = vadd.f32 %v567, %v631
  %v675 = vadd.f32 %v569, %v633
  %v676 = vadd.f32 %v571, %v635
  %v677 = vadd.f32 %v573, %v637
  %v678 = vadd.f32 %v575, %v639
  %v679 = vadd.f32 %v577, %v641
  %v680 = vadd.f32 %v579, %v643
  %v681 = vadd.f32 %v581, %v645
  %v682 = vadd.f32 %v583, %v647
  %v683 = vadd.f32 %v585, %v649
  %v684 = vadd.f32 %v587, %v651
  %v685 = vadd.f32 %v589, %v653
  %686 = vst.msk [vmem:[#allocation2] sm:$0xff] %vm104, %v654
  %687 = vst.msk [vmem:[#allocation2 + $0x8] sm:$0xff] %vm104, %v655
  %688 = vst.msk [vmem:[#allocation2 + $0x10] sm:$0xff] %vm104, %v656
  %689 = vst.msk [vmem:[#allocation2 + $0x18] sm:$0xff] %vm104, %v657
  %690 = vst.msk [vmem:[#allocation2 + $0x20] sm:$0xff] %vm104, %v658
  %691 = vst.msk [vmem:[#allocation2 + $0x28] sm:$0xff] %vm104, %v659
  %692 = vst.msk [vmem:[#allocation2 + $0x30] sm:$0xff] %vm104, %v660
  %693 = vst.msk [vmem:[#allocation2 + $0x38] sm:$0xff] %vm104, %v661
  %694 = vst.msk [vmem:[#allocation2 + $0x40] sm:$0xff] %vm104, %v662
  %695 = vst.msk [vmem:[#allocation2 + $0x48] sm:$0xff] %vm104, %v663
  %696 = vst.msk [vmem:[#allocation2 + $0x50] sm:$0xff] %vm104, %v664
  %697 = vst.msk [vmem:[#allocation2 + $0x58] sm:$0xff] %vm104, %v665
  %698 = vst.msk [vmem:[#allocation2 + $0x60] sm:$0xff] %vm104, %v666
  %699 = vst.msk [vmem:[#allocation2 + $0x68] sm:$0xff] %vm104, %v667
  %700 = vst.msk [vmem:[#allocation2 + $0x70] sm:$0xff] %vm104, %v668
  %701 = vst.msk [vmem:[#allocation2 + $0x78] sm:$0xff] %vm104, %v669
  %702 = vst.msk [vmem:[#allocation2 + $0x80] sm:$0xff] %vm104, %v670
  %703 = vst.msk [vmem:[#allocation2 + $0x88] sm:$0xff] %vm104, %v671
  %704 = vst.msk [vmem:[#allocation2 + $0x90] sm:$0xff] %vm104, %v672
  %705 = vst.msk [vmem:[#allocation2 + $0x98] sm:$0xff] %vm104, %v673
  %706 = vst.msk [vmem:[#allocation2 + $0xa0] sm:$0xff] %vm104, %v674
  %707 = vst.msk [vmem:[#allocation2 + $0xa8] sm:$0xff] %vm104, %v675
  %708 = vst.msk [vmem:[#allocation2 + $0xb0] sm:$0xff] %vm104, %v676
  %709 = vst.msk [vmem:[#allocation2 + $0xb8] sm:$0xff] %vm104, %v677
  %710 = vst.msk [vmem:[#allocation2 + $0xc0] sm:$0xff] %vm104, %v678
  %711 = vst.msk [vmem:[#allocation2 + $0xc8] sm:$0xff] %vm104, %v679
  %712 = vst.msk [vmem:[#allocation2 + $0xd0] sm:$0xff] %vm104, %v680
  %713 = vst.msk [vmem:[#allocation2 + $0xd8] sm:$0xff] %vm104, %v681
  %714 = vst.msk [vmem:[#allocation2 + $0xe0] sm:$0xff] %vm104, %v682
  %715 = vst.msk [vmem:[#allocation2 + $0xe8] sm:$0xff] %vm104, %v683
  %716 = vst.msk [vmem:[#allocation2 + $0xf0] sm:$0xff] %vm104, %v684
  %717 = vst.msk [vmem:[#allocation2 + $0xf8] sm:$0xff] %vm104, %v685
  %v718 = vld [vmem:[#allocation2] sm:$0xff]
  %v719 = vld [vmem:[#allocation2 + $0x8] sm:$0xff]
  %v720 = vadd.f32 %v718, %v719
  %721 = vst.msk [vmem:[#allocation3] sm:$0xff] %vm104, %v720
  %v722 = vld [vmem:[#allocation2 + $0x10] sm:$0xff]
  %v723 = vld [vmem:[#allocation2 + $0x18] sm:$0xff]
  %v724 = vadd.f32 %v722, %v723
  %725 = vst.msk [vmem:[#allocation3 + $0x8] sm:$0xff] %vm104, %v724
  %v726 = vld [vmem:[#allocation2 + $0x20] sm:$0xff]
  %v727 = vld [vmem:[#allocation2 + $0x28] sm:$0xff]
  %v728 = vadd.f32 %v726, %v727
  %729 = vst.msk [vmem:[#allocation3 + $0x10] sm:$0xff] %vm104, %v728
  %v730 = vld [vmem:[#allocation2 + $0x30] sm:$0xff]
  %v731 = vld [vmem:[#allocation2 + $0x38] sm:$0xff]
  %v732 = vadd.f32 %v730, %v731
  %733 = vst.msk [vmem:[#allocation3 + $0x18] sm:$0xff] %vm104, %v732
  %v734 = vld [vmem:[#allocation2 + $0x40] sm:$0xff]
  %v735 = vld [vmem:[#allocation2 + $0x48] sm:$0xff]
  %v736 = vadd.f32 %v734, %v735
  %737 = vst.msk [vmem:[#allocation3 + $0x20] sm:$0xff] %vm104, %v736
  %v738 = vld [vmem:[#allocation2 + $0x50] sm:$0xff]
  %v739 = vld [vmem:[#allocation2 + $0x58] sm:$0xff]
  %v740 = vadd.f32 %v738, %v739
  %741 = vst.msk [vmem:[#allocation3 + $0x28] sm:$0xff] %vm104, %v740
  %v742 = vld [vmem:[#allocation2 + $0x60] sm:$0xff]
  %v743 = vld [vmem:[#allocation2 + $0x68] sm:$0xff]
  %v744 = vadd.f32 %v742, %v743
  %745 = vst.msk [vmem:[#allocation3 + $0x30] sm:$0xff] %vm104, %v744
  %v746 = vld [vmem:[#allocation2 + $0x70] sm:$0xff]
  %v747 = vld [vmem:[#allocation2 + $0x78] sm:$0xff]
  %v748 = vadd.f32 %v746, %v747
  %749 = vst.msk [vmem:[#allocation3 + $0x38] sm:$0xff] %vm104, %v748
  %v750 = vld [vmem:[#allocation2 + $0x80] sm:$0xff]
  %v751 = vld [vmem:[#allocation2 + $0x88] sm:$0xff]
  %v752 = vadd.f32 %v750, %v751
  %753 = vst.msk [vmem:[#allocation3 + $0x40] sm:$0xff] %vm104, %v752
  %v754 = vld [vmem:[#allocation2 + $0x90] sm:$0xff]
  %v755 = vld [vmem:[#allocation2 + $0x98] sm:$0xff]
  %v756 = vadd.f32 %v754, %v755
  %757 = vst.msk [vmem:[#allocation3 + $0x48] sm:$0xff] %vm104, %v756
  %v758 = vld [vmem:[#allocation2 + $0xa0] sm:$0xff]
  %v759 = vld [vmem:[#allocation2 + $0xa8] sm:$0xff]
  %v760 = vadd.f32 %v758, %v759
  %761 = vst.msk [vmem:[#allocation3 + $0x50] sm:$0xff] %vm104, %v760
  %v762 = vld [vmem:[#allocation2 + $0xb0] sm:$0xff]
  %v763 = vld [vmem:[#allocation2 + $0xb8] sm:$0xff]
  %v764 = vadd.f32 %v762, %v763
  %765 = vst.msk [vmem:[#allocation3 + $0x58] sm:$0xff] %vm104, %v764
  %v766 = vld [vmem:[#allocation2 + $0xc0] sm:$0xff]
  %v767 = vld [vmem:[#allocation2 + $0xc8] sm:$0xff]
  %v768 = vadd.f32 %v766, %v767
  %769 = vst.msk [vmem:[#allocation3 + $0x60] sm:$0xff] %vm104, %v768
  %v770 = vld [vmem:[#allocation2 + $0xd0] sm:$0xff]
  %v771 = vld [vmem:[#allocation2 + $0xd8] sm:$0xff]
  %v772 = vadd.f32 %v770, %v771
  %773 = vst.msk [vmem:[#allocation3 + $0x68] sm:$0xff] %vm104, %v772
  %v774 = vld [vmem:[#allocation2 + $0xe0] sm:$0xff]
  %v775 = vld [vmem:[#allocation2 + $0xe8] sm:$0xff]
  %v776 = vadd.f32 %v774, %v775
  %777 = vst.msk [vmem:[#allocation3 + $0x70] sm:$0xff] %vm104, %v776
  %v778 = vld [vmem:[#allocation2 + $0xf0] sm:$0xff]
  %v779 = vld [vmem:[#allocation2 + $0xf8] sm:$0xff]
  %v780 = vadd.f32 %v778, %v779
  %781 = vst.msk [vmem:[#allocation3 + $0x78] sm:$0xff] %vm104, %v780
  %v782 = vld [vmem:[#allocation3] sm:$0xff]
  %v783 = vld [vmem:[#allocation3 + $0x8] sm:$0xff]
  %v784 = vld [vmem:[#allocation3 + $0x10] sm:$0xff]
  %v785 = vld [vmem:[#allocation3 + $0x18] sm:$0xff]
  %v786 = vld [vmem:[#allocation3 + $0x20] sm:$0xff]
  %v787 = vld [vmem:[#allocation3 + $0x28] sm:$0xff]
  %v788 = vld [vmem:[#allocation3 + $0x30] sm:$0xff]
  %v789 = vld [vmem:[#allocation3 + $0x38] sm:$0xff]
  %v790 = vld [vmem:[#allocation3 + $0x40] sm:$0xff]
  %v791 = vld [vmem:[#allocation3 + $0x48] sm:$0xff]
  %v792 = vld [vmem:[#allocation3 + $0x50] sm:$0xff]
  %v793 = vld [vmem:[#allocation3 + $0x58] sm:$0xff]
  %v794 = vld [vmem:[#allocation3 + $0x60] sm:$0xff]
  %v795 = vld [vmem:[#allocation3 + $0x68] sm:$0xff]
  %v796 = vld [vmem:[#allocation3 + $0x70] sm:$0xff]
  %v797 = vld [vmem:[#allocation3 + $0x78] sm:$0xff]
  %v799 = vlaneseq
  %v800 = vshrl.u32 %v799, 7
  %v801 = vsub.s32 0, %v800
  %v802 = vrot.slane %v526, %v801
  %v804 = vmul.f32 %v782, %v802
  %v805 = vmul.f32 %v783, %v802
  %v806 = vmul.f32 %v784, %v802
  %v807 = vmul.f32 %v785, %v802
  %v808 = vmul.f32 %v786, %v802
  %v809 = vmul.f32 %v787, %v802
  %v810 = vmul.f32 %v788, %v802
  %v811 = vmul.f32 %v789, %v802
  %v812 = vmul.f32 %v790, %v802
  %v813 = vmul.f32 %v791, %v802
  %v814 = vmul.f32 %v792, %v802
  %v815 = vmul.f32 %v793, %v802
  %v816 = vmul.f32 %v794, %v802
  %v817 = vmul.f32 %v795, %v802
  %v818 = vmul.f32 %v796, %v802
  %v819 = vmul.f32 %v797, %v802
  %v820 = vld [vmem:[%s3] sm:$0xf]
  %v821 = vlaneseq
  %v822 = vshrl.u32 %v821, 7
  %v823 = vsub.s32 0, %v822
  %v824 = vrot.slane %v523, %v823
  %v826 = vsel %vm104, %v804, 0
  %v829 = vsel %vm104, %v805, 0
  %v832 = vsel %vm104, %v806, 0
  %v835 = vsel %vm104, %v807, 0
  %v838 = vsel %vm104, %v808, 0
  %v841 = vsel %vm104, %v809, 0
  %v844 = vsel %vm104, %v810, 0
  %v847 = vsel %vm104, %v811, 0
  %v850 = vsel %vm104, %v812, 0
  %v853 = vsel %vm104, %v813, 0
  %v856 = vsel %vm104, %v814, 0
  %v859 = vsel %vm104, %v815, 0
  %v862 = vsel %vm104, %v816, 0
  %v865 = vsel %vm104, %v817, 0
  %v868 = vsel %vm104, %v818, 0
  %v871 = vsel %vm104, %v819, 0
  %v874 = vsel %vm452, %v820, 0
  %876 = vmatprep.subr.mxu0 0.0
  %877 = vmatpush1.msra.mxu0 %v874
  %878 = vmatprep.subr.mxu0 0.0
  %879 = vmatpush1.msra.mxu0 0.0
  %880 = vmatprep.subr.mxu0 0.0
  %881 = vmatpush1.msra.mxu0 0.0
  %882 = vmatprep.subr.mxu0 0.0
  %883 = vmatpush1.msra.mxu0 0.0
  %884 = vmatprep.subr.mxu0 0.0
  %885 = vmatpush1.msra.mxu0 0.0
  %886 = vmatprep.subr.mxu0 0.0
  %887 = vmatpush1.msra.mxu0 0.0
  %888 = vmatprep.subr.mxu0 0.0
  %889 = vmatpush1.msra.mxu0 0.0
  %890 = vmatprep.subr.mxu0 0.0
  %891 = vmatpush1.msra.mxu0 0.0
  %892 = vmatprep.subr.mxu0 0.0
  %893 = vmatpush1.msra.mxu0 0.0
  %894 = vmatprep.subr.mxu0 0.0
  %895 = vmatpush1.msra.mxu0 0.0
  %896 = vmatprep.subr.mxu0 0.0
  %897 = vmatpush1.msra.mxu0 0.0
  %898 = vmatprep.subr.mxu0 0.0
  %899 = vmatpush1.msra.mxu0 0.0
  %900 = vmatprep.subr.mxu0 0.0
  %901 = vmatpush1.msra.mxu0 0.0
  %902 = vmatprep.subr.mxu0 0.0
  %903 = vmatpush1.msra.mxu0 0.0
  %904 = vmatprep.subr.mxu0 0.0
  %905 = vmatpush1.msra.mxu0 0.0
  %906 = vmatprep.subr.mxu0 0.0
  %907 = vmatpush1.msra.mxu0 0.0
  %908 = vmatprep.subr.mxu0 0.0
  %909 = vmatpush1.msra.mxu0 0.0
  %910 = vmatprep.subr.mxu0 0.0
  %911 = vmatpush1.msra.mxu0 0.0
  %912 = vmatprep.subr.mxu0 0.0
  %913 = vmatpush1.msra.mxu0 0.0
  %914 = vmatprep.subr.mxu0 0.0
  %915 = vmatpush1.msra.mxu0 0.0
  %916 = vmatprep.subr.mxu0 0.0
  %917 = vmatpush1.msra.mxu0 0.0
  %918 = vmatprep.subr.mxu0 0.0
  %919 = vmatpush1.msra.mxu0 0.0
  %920 = vmatprep.subr.mxu0 0.0
  %921 = vmatpush1.msra.mxu0 0.0
  %922 = vmatprep.subr.mxu0 0.0
  %923 = vmatpush1.msra.mxu0 0.0
  %924 = vmatprep.subr.mxu0 0.0
  %925 = vmatpush1.msra.mxu0 0.0
  %926 = vmatprep.subr.mxu0 0.0
  %927 = vmatpush1.msra.mxu0 0.0
  %928 = vmatprep.subr.mxu0 0.0
  %929 = vmatpush1.msra.mxu0 0.0
  %930 = vmatprep.subr.mxu0 0.0
  %931 = vmatpush1.msra.mxu0 0.0
  %932 = vmatprep.subr.mxu0 0.0
  %933 = vmatpush1.msra.mxu0 0.0
  %934 = vmatprep.subr.mxu0 0.0
  %935 = vmatpush1.msra.mxu0 0.0
  %936 = vmatprep.subr.mxu0 0.0
  %937 = vmatpush1.msra.mxu0 0.0
  %938 = vmatprep.subr.mxu0 0.0
  %939 = vmatpush1.msra.mxu0 0.0
  %940 = vmatprep.mubr.f32.mxu0 0.0
  %941 = vmatmul.mubr.f32.gmra.mrb[0].mxu0 %v826
  %v942 = vpop.f32.mrb[0].mxu0
  %v943 = vadd.f32 %v824, %v942
  %v944 = vpop.f32.mrb[0].mxu0
  %945 = vmatprep.mubr.f32.mxu0 0.0
  %946 = vmatmul.mubr.f32.gmra.mrb[0].mxu0 %v829
  %v947 = vpop.f32.mrb[0].mxu0
  %v948 = vadd.f32 %v824, %v947
  %v949 = vpop.f32.mrb[0].mxu0
  %950 = vmatprep.mubr.f32.mxu0 0.0
  %951 = vmatmul.mubr.f32.gmra.mrb[0].mxu0 %v832
  %v952 = vpop.f32.mrb[0].mxu0
  %v953 = vadd.f32 %v824, %v952
  %v954 = vpop.f32.mrb[0].mxu0
  %955 = vmatprep.mubr.f32.mxu0 0.0
  %956 = vmatmul.mubr.f32.gmra.mrb[0].mxu0 %v835
  %v957 = vpop.f32.mrb[0].mxu0
  %v958 = vadd.f32 %v824, %v957
  %v959 = vpop.f32.mrb[0].mxu0
  %960 = vmatprep.mubr.f32.mxu0 0.0
  %961 = vmatmul.mubr.f32.gmra.mrb[0].mxu0 %v838
  %v962 = vpop.f32.mrb[0].mxu0
  %v963 = vadd.f32 %v824, %v962
  %v964 = vpop.f32.mrb[0].mxu0
  %965 = vmatprep.mubr.f32.mxu0 0.0
  %966 = vmatmul.mubr.f32.gmra.mrb[0].mxu0 %v841
  %v967 = vpop.f32.mrb[0].mxu0
  %v968 = vadd.f32 %v824, %v967
  %v969 = vpop.f32.mrb[0].mxu0
  %970 = vmatprep.mubr.f32.mxu0 0.0
  %971 = vmatmul.mubr.f32.gmra.mrb[0].mxu0 %v844
  %v972 = vpop.f32.mrb[0].mxu0
  %v973 = vadd.f32 %v824, %v972
  %v974 = vpop.f32.mrb[0].mxu0
  %975 = vmatprep.mubr.f32.mxu0 0.0
  %976 = vmatmul.mubr.f32.gmra.mrb[0].mxu0 %v847
  %v977 = vpop.f32.mrb[0].mxu0
  %v978 = vadd.f32 %v824, %v977
  %v979 = vpop.f32.mrb[0].mxu0
  %980 = vmatprep.mubr.f32.mxu0 0.0
  %981 = vmatmul.mubr.f32.gmra.mrb[0].mxu0 %v850
  %v982 = vpop.f32.mrb[0].mxu0
  %v983 = vadd.f32 %v824, %v982
  %v984 = vpop.f32.mrb[0].mxu0
  %985 = vmatprep.mubr.f32.mxu0 0.0
  %986 = vmatmul.mubr.f32.gmra.mrb[0].mxu0 %v853
  %v987 = vpop.f32.mrb[0].mxu0
  %v988 = vadd.f32 %v824, %v987
  %v989 = vpop.f32.mrb[0].mxu0
  %990 = vmatprep.mubr.f32.mxu0 0.0
  %991 = vmatmul.mubr.f32.gmra.mrb[0].mxu0 %v856
  %v992 = vpop.f32.mrb[0].mxu0
  %v993 = vadd.f32 %v824, %v992
  %v994 = vpop.f32.mrb[0].mxu0
  %995 = vmatprep.mubr.f32.mxu0 0.0
  %996 = vmatmul.mubr.f32.gmra.mrb[0].mxu0 %v859
  %v997 = vpop.f32.mrb[0].mxu0
  %v998 = vadd.f32 %v824, %v997
  %v999 = vpop.f32.mrb[0].mxu0
  %1000 = vmatprep.mubr.f32.mxu0 0.0
  %1001 = vmatmul.mubr.f32.gmra.mrb[0].mxu0 %v862
  %v1002 = vpop.f32.mrb[0].mxu0
  %v1003 = vadd.f32 %v824, %v1002
  %v1004 = vpop.f32.mrb[0].mxu0
  %1005 = vmatprep.mubr.f32.mxu0 0.0
  %1006 = vmatmul.mubr.f32.gmra.mrb[0].mxu0 %v865
  %v1007 = vpop.f32.mrb[0].mxu0
  %v1008 = vadd.f32 %v824, %v1007
  %v1009 = vpop.f32.mrb[0].mxu0
  %1010 = vmatprep.mubr.f32.mxu0 0.0
  %1011 = vmatmul.mubr.f32.gmra.mrb[0].mxu0 %v868
  %v1012 = vpop.f32.mrb[0].mxu0
  %v1013 = vadd.f32 %v824, %v1012
  %v1014 = vpop.f32.mrb[0].mxu0
  %1015 = vmatprep.mubr.f32.mxu0 0.0
  %1016 = vmatmul.mubr.f32.gmra.mrb[0].mxu0 %v871
  %v1017 = vpop.f32.mrb[0].mxu0
  %v1018 = vadd.f32 %v824, %v1017
  %v1019 = vpop.f32.mrb[0].mxu0
  %1020 = vdwg.mxu0
  %vm1021 = vcmask 64512
  %1022 = vst.msk [vmem:[#allocation4] sm:$0xff] %vm1021, %v943
  %1023 = vst.msk [vmem:[#allocation4 + $0x8] sm:$0xff] %vm1021, %v948
  %1024 = vst.msk [vmem:[#allocation4 + $0x10] sm:$0xff] %vm1021, %v953
  %1025 = vst.msk [vmem:[#allocation4 + $0x18] sm:$0xff] %vm1021, %v958
  %1026 = vst.msk [vmem:[#allocation4 + $0x20] sm:$0xff] %vm1021, %v963
  %1027 = vst.msk [vmem:[#allocation4 + $0x28] sm:$0xff] %vm1021, %v968
  %1028 = vst.msk [vmem:[#allocation4 + $0x30] sm:$0xff] %vm1021, %v973
  %1029 = vst.msk [vmem:[#allocation4 + $0x38] sm:$0xff] %vm1021, %v978
  %1030 = vst.msk [vmem:[#allocation4 + $0x40] sm:$0xff] %vm1021, %v983
  %1031 = vst.msk [vmem:[#allocation4 + $0x48] sm:$0xff] %vm1021, %v988
  %1032 = vst.msk [vmem:[#allocation4 + $0x50] sm:$0xff] %vm1021, %v993
  %1033 = vst.msk [vmem:[#allocation4 + $0x58] sm:$0xff] %vm1021, %v998
  %1034 = vst.msk [vmem:[#allocation4 + $0x60] sm:$0xff] %vm1021, %v1003
  %1035 = vst.msk [vmem:[#allocation4 + $0x68] sm:$0xff] %vm1021, %v1008
  %1036 = vst.msk [vmem:[#allocation4 + $0x70] sm:$0xff] %vm1021, %v1013
  %1037 = vst.msk [vmem:[#allocation4 + $0x78] sm:$0xff] %vm1021, %v1018
  %v1038 = vsel %vm1021, %v943, 0.0
  %v1039 = vsel %vm1021, %v948, 0.0
  %v1040 = vadd.f32 %v1038, %v1039
  %v1041 = vsel %vm1021, %v953, 0.0
  %v1042 = vadd.f32 %v1040, %v1041
  %v1043 = vsel %vm1021, %v958, 0.0
  %v1044 = vadd.f32 %v1042, %v1043
  %v1045 = vsel %vm1021, %v963, 0.0
  %v1046 = vadd.f32 %v1044, %v1045
  %v1047 = vsel %vm1021, %v968, 0.0
  %v1048 = vadd.f32 %v1046, %v1047
  %v1049 = vsel %vm1021, %v973, 0.0
  %v1050 = vadd.f32 %v1048, %v1049
  %v1051 = vsel %vm1021, %v978, 0.0
  %v1052 = vadd.f32 %v1050, %v1051
  %v1053 = vsel %vm1021, %v983, 0.0
  %v1054 = vadd.f32 %v1052, %v1053
  %v1055 = vsel %vm1021, %v988, 0.0
  %v1056 = vadd.f32 %v1054, %v1055
  %v1057 = vsel %vm1021, %v993, 0.0
  %v1058 = vadd.f32 %v1056, %v1057
  %v1059 = vsel %vm1021, %v998, 0.0
  %v1060 = vadd.f32 %v1058, %v1059
  %v1061 = vsel %vm1021, %v1003, 0.0
  %v1062 = vadd.f32 %v1060, %v1061
  %v1063 = vsel %vm1021, %v1008, 0.0
  %v1064 = vadd.f32 %v1062, %v1063
  %v1065 = vsel %vm1021, %v1013, 0.0
  %v1066 = vadd.f32 %v1064, %v1065
  %v1067 = vsel %vm1021, %v1018, 0.0
  %v1068 = vadd.f32 %v1066, %v1067
  %v1069 = vrot.slane %v1068, 4
  %v1070 = vadd.f32 %v1068, %v1069
  %v1071 = vrot.slane %v1070, 2
  %v1072 = vadd.f32 %v1070, %v1071
  %v1073 = vrot.slane %v1072, 1
  %v1074 = vadd.f32 %v1072, %v1073
  %v1075 = vmul.f32 %v943, %v943
  %v1076 = vmul.f32 %v948, %v948
  %v1077 = vmul.f32 %v953, %v953
  %v1078 = vmul.f32 %v958, %v958
  %v1079 = vmul.f32 %v963, %v963
  %v1080 = vmul.f32 %v968, %v968
  %v1081 = vmul.f32 %v973, %v973
  %v1082 = vmul.f32 %v978, %v978
  %v1083 = vmul.f32 %v983, %v983
  %v1084 = vmul.f32 %v988, %v988
  %v1085 = vmul.f32 %v993, %v993
  %v1086 = vmul.f32 %v998, %v998
  %v1087 = vmul.f32 %v1003, %v1003
  %v1088 = vmul.f32 %v1008, %v1008
  %v1089 = vmul.f32 %v1013, %v1013
  %v1090 = vmul.f32 %v1018, %v1018
  %v1091 = vsel %vm1021, %v1075, 0.0
  %v1092 = vsel %vm1021, %v1076, 0.0
  %v1093 = vadd.f32 %v1091, %v1092
  %v1094 = vsel %vm1021, %v1077, 0.0
  %v1095 = vadd.f32 %v1093, %v1094
  %v1096 = vsel %vm1021, %v1078, 0.0
  %v1097 = vadd.f32 %v1095, %v1096
  %v1098 = vsel %vm1021, %v1079, 0.0
  %v1099 = vadd.f32 %v1097, %v1098
  %v1100 = vsel %vm1021, %v1080, 0.0
  %v1101 = vadd.f32 %v1099, %v1100
  %v1102 = vsel %vm1021, %v1081, 0.0
  %v1103 = vadd.f32 %v1101, %v1102
  %v1104 = vsel %vm1021, %v1082, 0.0
  %v1105 = vadd.f32 %v1103, %v1104
  %v1106 = vsel %vm1021, %v1083, 0.0
  %v1107 = vadd.f32 %v1105, %v1106
  %v1108 = vsel %vm1021, %v1084, 0.0
  %v1109 = vadd.f32 %v1107, %v1108
  %v1110 = vsel %vm1021, %v1085, 0.0
  %v1111 = vadd.f32 %v1109, %v1110
  %v1112 = vsel %vm1021, %v1086, 0.0
  %v1113 = vadd.f32 %v1111, %v1112
  %v1114 = vsel %vm1021, %v1087, 0.0
  %v1115 = vadd.f32 %v1113, %v1114
  %v1116 = vsel %vm1021, %v1088, 0.0
  %v1117 = vadd.f32 %v1115, %v1116
  %v1118 = vsel %vm1021, %v1089, 0.0
  %v1119 = vadd.f32 %v1117, %v1118
  %v1120 = vsel %vm1021, %v1090, 0.0
  %v1121 = vadd.f32 %v1119, %v1120
  %v1122 = vrot.slane %v1121, 4
  %v1123 = vadd.f32 %v1121, %v1122
  %v1124 = vrot.slane %v1123, 2
  %v1125 = vadd.f32 %v1123, %v1124
  %v1126 = vrot.slane %v1125, 1
  %v1127 = vadd.f32 %v1125, %v1126
  %v1128 = vmul.f32 %v1074, 0.0078125
  %v1129 = vmul.f32 %v1127, 0.0078125
  %v1130 = vmul.f32 %v1128, %v1128
  %v1131 = vsub.f32 %v1129, %v1130
  %v1132 = vmax.f32 %v1131, 0.0
  %v1133 = vld [vmem:[%s5] sm:$0x1]
  %v1134 = vadd.f32 %v1132, 1e-05
  %v1135 = vrsqrt.pop %v1134
  %v1136 = vmul.f32 %v1133, %v1135
  %v1137 = vld [vmem:[%s6] sm:$0x1]
  %v1138 = vmul.f32 %v1128, %v1136
  %v1139 = vsub.f32 %v1137, %v1138
  %v1140 = vld [vmem:[%s7] sm:$0xff]
  %v1141 = vld [vmem:[%s8] sm:$0x1]
  %v1143 = vsel %vm1021, %v1139, 0
  %1145 = vmatprep.subr.mxu0 0.0
  %1146 = vmatpush1.msra.mxu0 %v1140
  %1147 = vmatprep.subr.mxu0 0.0
  %1148 = vmatpush1.msra.mxu0 0.0
  %1149 = vmatprep.subr.mxu0 0.0
  %1150 = vmatpush1.msra.mxu0 0.0
  %1151 = vmatprep.subr.mxu0 0.0
  %1152 = vmatpush1.msra.mxu0 0.0
  %1153 = vmatprep.subr.mxu0 0.0
  %1154 = vmatpush1.msra.mxu0 0.0
  %1155 = vmatprep.subr.mxu0 0.0
  %1156 = vmatpush1.msra.mxu0 0.0
  %1157 = vmatprep.subr.mxu0 0.0
  %1158 = vmatpush1.msra.mxu0 0.0
  %1159 = vmatprep.subr.mxu0 0.0
  %1160 = vmatpush1.msra.mxu0 0.0
  %1161 = vmatprep.subr.mxu0 0.0
  %1162 = vmatpush1.msra.mxu0 0.0
  %1163 = vmatprep.subr.mxu0 0.0
  %1164 = vmatpush1.msra.mxu0 0.0
  %1165 = vmatprep.subr.mxu0 0.0
  %1166 = vmatpush1.msra.mxu0 0.0
  %1167 = vmatprep.subr.mxu0 0.0
  %1168 = vmatpush1.msra.mxu0 0.0
  %1169 = vmatprep.subr.mxu0 0.0
  %1170 = vmatpush1.msra.mxu0 0.0
  %1171 = vmatprep.subr.mxu0 0.0
  %1172 = vmatpush1.msra.mxu0 0.0
  %1173 = vmatprep.subr.mxu0 0.0
  %1174 = vmatpush1.msra.mxu0 0.0
  %1175 = vmatprep.subr.mxu0 0.0
  %1176 = vmatpush1.msra.mxu0 0.0
  %1177 = vmatprep.subr.mxu0 0.0
  %1178 = vmatpush1.msra.mxu0 0.0
  %1179 = vmatprep.subr.mxu0 0.0
  %1180 = vmatpush1.msra.mxu0 0.0
  %1181 = vmatprep.subr.mxu0 0.0
  %1182 = vmatpush1.msra.mxu0 0.0
  %1183 = vmatprep.subr.mxu0 0.0
  %1184 = vmatpush1.msra.mxu0 0.0
  %1185 = vmatprep.subr.mxu0 0.0
  %1186 = vmatpush1.msra.mxu0 0.0
  %1187 = vmatprep.subr.mxu0 0.0
  %1188 = vmatpush1.msra.mxu0 0.0
  %1189 = vmatprep.subr.mxu0 0.0
  %1190 = vmatpush1.msra.mxu0 0.0
  %1191 = vmatprep.subr.mxu0 0.0
  %1192 = vmatpush1.msra.mxu0 0.0
  %1193 = vmatprep.subr.mxu0 0.0
  %1194 = vmatpush1.msra.mxu0 0.0
  %1195 = vmatprep.subr.mxu0 0.0
  %1196 = vmatpush1.msra.mxu0 0.0
  %1197 = vmatprep.subr.mxu0 0.0
  %1198 = vmatpush1.msra.mxu0 0.0
  %1199 = vmatprep.subr.mxu0 0.0
  %1200 = vmatpush1.msra.mxu0 0.0
  %1201 = vmatprep.subr.mxu0 0.0
  %1202 = vmatpush1.msra.mxu0 0.0
  %1203 = vmatprep.subr.mxu0 0.0
  %1204 = vmatpush1.msra.mxu0 0.0
  %1205 = vmatprep.subr.mxu0 0.0
  %1206 = vmatpush1.msra.mxu0 0.0
  %1207 = vmatprep.subr.mxu0 0.0
  %1208 = vmatpush1.msra.mxu0 0.0
  %1209 = vmatprep.mubr.f32.mxu0 0.0
  %1210 = vmatmul.mubr.f32.gmra.mrb[0].mxu0 %v1143
  %v1211 = vpop.f32.mrb[0].mxu0
  %v1212 = vadd.f32 %v1141, %v1211
  %v1213 = vpop.f32.mrb[0].mxu0
  %1214 = vdwg.mxu0
  %v1215 = vmul.f32 %v1136, 0.25
  %v1216 = vld [vmem:[#allocation4] ss:$2 sm:$0xff]
  %s1217 = scalar_lea.vmem [#allocation4], 16
  %v1218 = vld [vmem:[%s1217] ss:$2 sm:$0xff]
  %s1219 = scalar_lea.vmem [#allocation4], 32
  %v1220 = vld [vmem:[%s1219] ss:$2 sm:$0xff]
  %s1221 = scalar_lea.vmem [#allocation4], 48
  %v1222 = vld [vmem:[%s1221] ss:$2 sm:$0xff]
  %s1223 = scalar_lea.vmem [#allocation4], 64
  %v1224 = vld [vmem:[%s1223] ss:$2 sm:$0xff]
  %s1225 = scalar_lea.vmem [#allocation4], 80
  %v1226 = vld [vmem:[%s1225] ss:$2 sm:$0xff]
  %s1227 = scalar_lea.vmem [#allocation4], 96
  %v1228 = vld [vmem:[%s1227] ss:$2 sm:$0xff]
  %s1229 = scalar_lea.vmem [#allocation4], 112
  %v1230 = vld [vmem:[%s1229] ss:$2 sm:$0xff]
  %s1231 = scalar_lea.vmem [#allocation4], 1
  %v1232 = vld [vmem:[%s1231] ss:$2 sm:$0xff]
  %s1233 = scalar_lea.vmem [#allocation4], 17
  %v1234 = vld [vmem:[%s1233] ss:$2 sm:$0xff]
  %s1235 = scalar_lea.vmem [#allocation4], 33
  %v1236 = vld [vmem:[%s1235] ss:$2 sm:$0xff]
  %s1237 = scalar_lea.vmem [#allocation4], 49
  %v1238 = vld [vmem:[%s1237] ss:$2 sm:$0xff]
  %s1239 = scalar_lea.vmem [#allocation4], 65
  %v1240 = vld [vmem:[%s1239] ss:$2 sm:$0xff]
  %s1241 = scalar_lea.vmem [#allocation4], 81
  %v1242 = vld [vmem:[%s1241] ss:$2 sm:$0xff]
  %s1243 = scalar_lea.vmem [#allocation4], 97
  %v1244 = vld [vmem:[%s1243] ss:$2 sm:$0xff]
  %s1245 = scalar_lea.vmem [#allocation4], 113
  %v1246 = vld [vmem:[%s1245] ss:$2 sm:$0xff]
  %v1247 = vadd.f32 %v1216, %v1232
  %v1248 = vadd.f32 %v1218, %v1234
  %v1249 = vadd.f32 %v1220, %v1236
  %v1250 = vadd.f32 %v1222, %v1238
  %v1251 = vadd.f32 %v1224, %v1240
  %v1252 = vadd.f32 %v1226, %v1242
  %v1253 = vadd.f32 %v1228, %v1244
  %v1254 = vadd.f32 %v1230, %v1246
  %1255 = vst.msk [vmem:[#allocation5] sm:$0xff] %vm1021, %v1247
  %1256 = vst.msk [vmem:[#allocation5 + $0x8] sm:$0xff] %vm1021, %v1248
  %1257 = vst.msk [vmem:[#allocation5 + $0x10] sm:$0xff] %vm1021, %v1249
  %1258 = vst.msk [vmem:[#allocation5 + $0x18] sm:$0xff] %vm1021, %v1250
  %1259 = vst.msk [vmem:[#allocation5 + $0x20] sm:$0xff] %vm1021, %v1251
  %1260 = vst.msk [vmem:[#allocation5 + $0x28] sm:$0xff] %vm1021, %v1252
  %1261 = vst.msk [vmem:[#allocation5 + $0x30] sm:$0xff] %vm1021, %v1253
  %1262 = vst.msk [vmem:[#allocation5 + $0x38] sm:$0xff] %vm1021, %v1254
  %v1263 = vld [vmem:[#allocation5] sm:$0xf]
  %v1264 = vld [vmem:[#allocation5 + $0x4] sm:$0xf]
  %v1265 = vadd.f32 %v1263, %v1264
  %vm1266 = vcmask 60416
  %1267 = vst.msk [vmem:[#allocation6] sm:$0xf] %vm1266, %v1265
  %v1268 = vld [vmem:[#allocation5 + $0x8] sm:$0xf]
  %v1269 = vld [vmem:[#allocation5 + $0xc] sm:$0xf]
  %v1270 = vadd.f32 %v1268, %v1269
  %1271 = vst.msk [vmem:[#allocation6 + $0x4] sm:$0xf] %vm1266, %v1270
  %v1272 = vld [vmem:[#allocation5 + $0x10] sm:$0xf]
  %v1273 = vld [vmem:[#allocation5 + $0x14] sm:$0xf]
  %v1274 = vadd.f32 %v1272, %v1273
  %1275 = vst.msk [vmem:[#allocation6 + $0x8] sm:$0xf] %vm1266, %v1274
  %v1276 = vld [vmem:[#allocation5 + $0x18] sm:$0xf]
  %v1277 = vld [vmem:[#allocation5 + $0x1c] sm:$0xf]
  %v1278 = vadd.f32 %v1276, %v1277
  %1279 = vst.msk [vmem:[#allocation6 + $0xc] sm:$0xf] %vm1266, %v1278
  %v1280 = vld [vmem:[#allocation5 + $0x20] sm:$0xf]
  %v1281 = vld [vmem:[#allocation5 + $0x24] sm:$0xf]
  %v1282 = vadd.f32 %v1280, %v1281
  %1283 = vst.msk [vmem:[#allocation6 + $0x10] sm:$0xf] %vm1266, %v1282
  %v1284 = vld [vmem:[#allocation5 + $0x28] sm:$0xf]
  %v1285 = vld [vmem:[#allocation5 + $0x2c] sm:$0xf]
  %v1286 = vadd.f32 %v1284, %v1285
  %1287 = vst.msk [vmem:[#allocation6 + $0x14] sm:$0xf] %vm1266, %v1286
  %v1288 = vld [vmem:[#allocation5 + $0x30] sm:$0xf]
  %v1289 = vld [vmem:[#allocation5 + $0x34] sm:$0xf]
  %v1290 = vadd.f32 %v1288, %v1289
  %1291 = vst.msk [vmem:[#allocation6 + $0x18] sm:$0xf] %vm1266, %v1290
  %v1292 = vld [vmem:[#allocation5 + $0x38] sm:$0xf]
  %v1293 = vld [vmem:[#allocation5 + $0x3c] sm:$0xf]
  %v1294 = vadd.f32 %v1292, %v1293
  %1295 = vst.msk [vmem:[#allocation6 + $0x1c] sm:$0xf] %vm1266, %v1294
  %v1296 = vld [vmem:[#allocation6] sm:$0xff]
  %v1297 = vld [vmem:[#allocation6 + $0x8] sm:$0xff]
  %v1298 = vld [vmem:[#allocation6 + $0x10] sm:$0xff]
  %v1299 = vld [vmem:[#allocation6 + $0x18] sm:$0xff]
  %v1301 = vlaneseq
  %v1302 = vshrl.u32 %v1301, 7
  %v1303 = vsub.s32 0, %v1302
  %v1304 = vrot.slane %v1215, %v1303
  %v1306 = vmul.f32 %v1296, %v1304
  %v1307 = vmul.f32 %v1297, %v1304
  %v1308 = vmul.f32 %v1298, %v1304
  %v1309 = vmul.f32 %v1299, %v1304
  %v1310 = vld [vmem:[%s7] sm:$0xff]
  %v1311 = vlaneseq
  %v1312 = vshrl.u32 %v1311, 7
  %v1313 = vsub.s32 0, %v1312
  %v1314 = vrot.slane %v1212, %v1313
  %v1316 = vsel %vm1021, %v1306, 0
  %v1319 = vsel %vm1021, %v1307, 0
  %v1322 = vsel %vm1021, %v1308, 0
  %v1325 = vsel %vm1021, %v1309, 0
  %1327 = vmatprep.subr.mxu0 0.0
  %1328 = vmatpush1.msra.mxu0 %v1310
  %1329 = vmatprep.subr.mxu0 0.0
  %1330 = vmatpush1.msra.mxu0 0.0
  %1331 = vmatprep.subr.mxu0 0.0
  %1332 = vmatpush1.msra.mxu0 0.0
  %1333 = vmatprep.subr.mxu0 0.0
  %1334 = vmatpush1.msra.mxu0 0.0
  %1335 = vmatprep.subr.mxu0 0.0
  %1336 = vmatpush1.msra.mxu0 0.0
  %1337 = vmatprep.subr.mxu0 0.0
  %1338 = vmatpush1.msra.mxu0 0.0
  %1339 = vmatprep.subr.mxu0 0.0
  %1340 = vmatpush1.msra.mxu0 0.0
  %1341 = vmatprep.subr.mxu0 0.0
  %1342 = vmatpush1.msra.mxu0 0.0
  %1343 = vmatprep.subr.mxu0 0.0
  %1344 = vmatpush1.msra.mxu0 0.0
  %1345 = vmatprep.subr.mxu0 0.0
  %1346 = vmatpush1.msra.mxu0 0.0
  %1347 = vmatprep.subr.mxu0 0.0
  %1348 = vmatpush1.msra.mxu0 0.0
  %1349 = vmatprep.subr.mxu0 0.0
  %1350 = vmatpush1.msra.mxu0 0.0
  %1351 = vmatprep.subr.mxu0 0.0
  %1352 = vmatpush1.msra.mxu0 0.0
  %1353 = vmatprep.subr.mxu0 0.0
  %1354 = vmatpush1.msra.mxu0 0.0
  %1355 = vmatprep.subr.mxu0 0.0
  %1356 = vmatpush1.msra.mxu0 0.0
  %1357 = vmatprep.subr.mxu0 0.0
  %1358 = vmatpush1.msra.mxu0 0.0
  %1359 = vmatprep.subr.mxu0 0.0
  %1360 = vmatpush1.msra.mxu0 0.0
  %1361 = vmatprep.subr.mxu0 0.0
  %1362 = vmatpush1.msra.mxu0 0.0
  %1363 = vmatprep.subr.mxu0 0.0
  %1364 = vmatpush1.msra.mxu0 0.0
  %1365 = vmatprep.subr.mxu0 0.0
  %1366 = vmatpush1.msra.mxu0 0.0
  %1367 = vmatprep.subr.mxu0 0.0
  %1368 = vmatpush1.msra.mxu0 0.0
  %1369 = vmatprep.subr.mxu0 0.0
  %1370 = vmatpush1.msra.mxu0 0.0
  %1371 = vmatprep.subr.mxu0 0.0
  %1372 = vmatpush1.msra.mxu0 0.0
  %1373 = vmatprep.subr.mxu0 0.0
  %1374 = vmatpush1.msra.mxu0 0.0
  %1375 = vmatprep.subr.mxu0 0.0
  %1376 = vmatpush1.msra.mxu0 0.0
  %1377 = vmatprep.subr.mxu0 0.0
  %1378 = vmatpush1.msra.mxu0 0.0
  %1379 = vmatprep.subr.mxu0 0.0
  %1380 = vmatpush1.msra.mxu0 0.0
  %1381 = vmatprep.subr.mxu0 0.0
  %1382 = vmatpush1.msra.mxu0 0.0
  %1383 = vmatprep.subr.mxu0 0.0
  %1384 = vmatpush1.msra.mxu0 0.0
  %1385 = vmatprep.subr.mxu0 0.0
  %1386 = vmatpush1.msra.mxu0 0.0
  %1387 = vmatprep.subr.mxu0 0.0
  %1388 = vmatpush1.msra.mxu0 0.0
  %1389 = vmatprep.subr.mxu0 0.0
  %1390 = vmatpush1.msra.mxu0 0.0
  %1391 = vmatprep.mubr.f32.mxu0 0.0
  %1392 = vmatmul.mubr.f32.gmra.mrb[0].mxu0 %v1316
  %v1393 = vpop.f32.mrb[0].mxu0
  %v1394 = vadd.f32 %v1314, %v1393
  %v1395 = vpop.f32.mrb[0].mxu0
  %1396 = vmatprep.mubr.f32.mxu0 0.0
  %1397 = vmatmul.mubr.f32.gmra.mrb[0].mxu0 %v1319
  %v1398 = vpop.f32.mrb[0].mxu0
  %v1399 = vadd.f32 %v1314, %v1398
  %v1400 = vpop.f32.mrb[0].mxu0
  %1401 = vmatprep.mubr.f32.mxu0 0.0
  %1402 = vmatmul.mubr.f32.gmra.mrb[0].mxu0 %v1322
  %v1403 = vpop.f32.mrb[0].mxu0
  %v1404 = vadd.f32 %v1314, %v1403
  %v1405 = vpop.f32.mrb[0].mxu0
  %1406 = vmatprep.mubr.f32.mxu0 0.0
  %1407 = vmatmul.mubr.f32.gmra.mrb[0].mxu0 %v1325
  %v1408 = vpop.f32.mrb[0].mxu0
  %v1409 = vadd.f32 %v1314, %v1408
  %v1410 = vpop.f32.mrb[0].mxu0
  %1411 = vdwg.mxu0
  %v1412 = vld [vmem:[%s9] sm:$0xff]
  %v1413 = vld [vmem:[%s9 + $0x8] sm:$0xff]
  %v1414 = vmul.f32 %v1394, %v1412
  %v1415 = vmul.f32 %v1399, %v1413
  %vm1416 = vcmask 130048
  %v1417 = vsel %vm1416, %v1414, 0.0
  %1418 = vadd.xlane.f32.xlu0 %v1417
  %v1419 = vpop.xlane.xlu0 %1418
  %v1420 = vsel %vm1416, %v1415, 0.0
  %1421 = vadd.xlane.f32.xlu0 %v1420
  %v1422 = vpop.xlane.xlu0 %1421
  %v1423 = vadd.f32 %v1419, %v1422
  %v1424 = vrot.slane %v1423, 4
  %v1425 = vadd.f32 %v1423, %v1424
  %v1426 = vrot.slane %v1425, 2
  %v1427 = vadd.f32 %v1425, %v1426
  %v1428 = vrot.slane %v1427, 1
  %v1429 = vadd.f32 %v1427, %v1428
  %v1430 = vld [vmem:[#allocation7] sm:$0x1]
  %v1431 = vadd.f32 %v1429, %v1430
  %vm1432 = vcmask 0
  %1433 = vst.msk [vmem:[%s11] sm:$0x1] %vm1432, %v1431
  %v1434 = vmul.f32 %v1404, %v1412
  %v1435 = vmul.f32 %v1409, %v1413
  %v1436 = vsel %vm1416, %v1434, 0.0
  %1437 = vadd.xlane.f32.xlu0 %v1436
  %v1438 = vpop.xlane.xlu0 %1437
  %v1439 = vsel %vm1416, %v1435, 0.0
  %1440 = vadd.xlane.f32.xlu0 %v1439
  %v1441 = vpop.xlane.xlu0 %1440
  %v1442 = vadd.f32 %v1438, %v1441
  %v1443 = vrot.slane %v1442, 4
  %v1444 = vadd.f32 %v1442, %v1443
  %v1445 = vrot.slane %v1444, 2
  %v1446 = vadd.f32 %v1444, %v1445
  %v1447 = vrot.slane %v1446, 1
  %v1448 = vadd.f32 %v1446, %v1447
  %v1449 = vld [vmem:[#allocation7] sm:$0x1]
  %v1450 = vadd.f32 %v1448, %v1449
  %1451 = vst.msk [vmem:[%s11 + $0x1] sm:$0x1] %vm1432, %v1450
  // Predicated region
  $region46: #{tpu_custom_call.1} parent=0 // pred_check
    _
  $region47: #{tpu_custom_call.1} parent=0 // pred_check_branch
    %1453 = sbr.rel (0) target = $region49
  $region48: #{tpu_custom_call.1} parent=0 // pred_region
    _
  $region49: #{tpu_custom_call.1} parent=0 // pred_fallthru
    _
  // Predicated region
  $region50: #{tpu_custom_call.1} parent=0 // pred_check
    _
  $region51: #{tpu_custom_call.1} parent=0 // pred_check_branch
    %1455 = sbr.rel (0) target = $region53
  $region52: #{tpu_custom_call.1} parent=0 // pred_region
    _
  $region53: #{tpu_custom_call.1} parent=0 // pred_fallthru
    _

</llo_original>
